<compile_context>
chip_gen: v7x
topology: tpu7x:2x2x1
jax: 0.10.0
libtpu: 0.0.40
codegen_flags: <defaults>
</compile_context>

<pallas_src>
import math
import functools

import jax
import jax.numpy as jnp
from jax.experimental import pallas as pl
from jax.experimental.pallas import tpu as pltpu

# ----------------------------- configuration --------------------------------
D_MODEL = 32        # d_model
NHEAD = 4           # nhead
HEAD_DIM = D_MODEL // NHEAD
DIM_FF = 64         # dim_feedforward (small for the synthetic test)
SEQ = 8             # sequence length
BATCH = 2           # batch size
LN_EPS = 1e-5       # torch.nn.LayerNorm default


# ------------------------------- kernel --------------------------------------
def _encoder_layer_kernel(
    src_ref, pos_ref,
    wqk_ref, bqk_ref, wv_ref, bv_ref,
    wo_ref, bo_ref,
    w1_ref, b1_ref, w2_ref, b2_ref,
    g1_ref, be1_ref, g2_ref, be2_ref,
    out_ref,
    *, batch, nhead,
):
    n, d = src_ref.shape                       # (S*B, D) flattened slab
    head_dim = d // nhead

    src = src_ref[...]                         # (N, D)
    x_qk = src + pos_ref[...]                  # q = k = src + pos (with_pos_embed)

    # --- fused Q|K projection (scale folded into Wq/bq host-side); V from src ---
    qk = jnp.dot(x_qk, wqk_ref[...], preferred_element_type=jnp.float32) + bqk_ref[...]
    v = jnp.dot(src, wv_ref[...], preferred_element_type=jnp.float32) + bv_ref[...]
    q = qk[:, :d]
    k = qk[:, d:]

    # --- additive mask: rows only attend within their own batch element ---
    # flattened row r = (s, b) with b = r % batch
    rows = jax.lax.broadcasted_iota(jnp.int32, (n, n), 0)
    cols = jax.lax.broadcasted_iota(jnp.int32, (n, n), 1)
    same_batch = (rows % batch) == (cols % batch)
    neg_big = jnp.float32(-1e30)

    # --- attention: one (N,N) score / softmax / PV matmul per head, output
    #     projection accumulated per head (no concatenate / relayout) ---
    wo = wo_ref[...]
    attn = jnp.zeros((n, d), jnp.float32)
    for h in range(nhead):                     # static unroll (nhead = 4)
        sl = slice(h * head_dim, (h + 1) * head_dim)
        s = jnp.dot(q[:, sl], k[:, sl].T, preferred_element_type=jnp.float32)
        s = jnp.where(same_batch, s, neg_big)
        s = s - jnp.max(s, axis=-1, keepdims=True)
        p = jnp.exp(s)
        p = p * pl.reciprocal(jnp.sum(p, axis=-1, keepdims=True), approx=True)
        o_h = jnp.dot(p, v[:, sl], preferred_element_type=jnp.float32)
        attn = attn + jnp.dot(o_h, wo[sl, :], preferred_element_type=jnp.float32)
    attn = attn + bo_ref[...]

    # --- residual + LayerNorm1 (dropout1 == identity) ---
    x = src + attn
    mu = jnp.mean(x, axis=-1, keepdims=True)
    var = jnp.mean((x - mu) ** 2, axis=-1, keepdims=True)
    x = (x - mu) * jax.lax.rsqrt(var + LN_EPS) * g1_ref[...] + be1_ref[...]

    # --- feed-forward: linear1 -> relu -> linear2 (dropout == identity) ---
    h1 = jnp.dot(x, w1_ref[...], preferred_element_type=jnp.float32) + b1_ref[...]
    h1 = jnp.maximum(h1, 0.0)
    ff = jnp.dot(h1, w2_ref[...], preferred_element_type=jnp.float32) + b2_ref[...]

    # --- residual + LayerNorm2 (dropout2 == identity) ---
    y = x + ff
    mu = jnp.mean(y, axis=-1, keepdims=True)
    var = jnp.mean((y - mu) ** 2, axis=-1, keepdims=True)
    y = (y - mu) * jax.lax.rsqrt(var + LN_EPS) * g2_ref[...] + be2_ref[...]

    out_ref[...] = y.astype(out_ref.dtype)


# ------------------------------- wrapper --------------------------------------
def transformer_encoder_layer(src_sbd, pos_sbd, params):
    """src_sbd, pos_sbd: (seq, batch, d_model) exactly like the PyTorch module."""
    S, B, D = src_sbd.shape
    N = S * B
    # Contiguous (free) flatten — no transposes anywhere in the wrapper.
    x = src_sbd.reshape(N, D)
    pos = pos_sbd.reshape(N, D)

    # Fuse Q|K weights; fold the 1/sqrt(head_dim) scale into Wq / bq.
    scale = 1.0 / math.sqrt(D // NHEAD)
    wqk_t = jnp.concatenate([params["wq_t"] * scale, params["wk_t"]], axis=1)
    bqk = jnp.concatenate([params["bq"] * scale, params["bk"]], axis=1)

    args = (
        x, pos,
        wqk_t, bqk, params["wv_t"], params["bv"],
        params["wo_t"], params["bo"],
        params["w1_t"], params["b1"], params["w2_t"], params["b2"],
        params["g1"], params["be1"], params["g2"], params["be2"],
    )

    kernel = functools.partial(_encoder_layer_kernel, batch=B, nhead=NHEAD)

    out = pl.pallas_call(
        kernel,
        out_shape=jax.ShapeDtypeStruct((N, D), src_sbd.dtype),
        grid=(1,),                                    # single fused step
        in_specs=[pl.BlockSpec(a.shape, lambda i: (0, 0)) for a in args],
        out_specs=pl.BlockSpec((N, D), lambda i: (0, 0)),
        compiler_params=pltpu.CompilerParams(
            dimension_semantics=("arbitrary",)),
    )(*args)

    # Free reshape back to (seq, batch, d_model).
    return out.reshape(S, B, D)


# --------------------------- pure-JAX reference --------------------------------
def reference(src_sbd, pos_sbd, params):
    S, B, D = src_sbd.shape
    x = jnp.transpose(src_sbd, (1, 0, 2))     # (B, S, D)  (reference only)
    pos = jnp.transpose(pos_sbd, (1, 0, 2))
    qk = x + pos
    q = qk @ params["wq_t"] + params["bq"]
    k = qk @ params["wk_t"] + params["bk"]
    v = x @ params["wv_t"] + params["bv"]

    def split_heads(t):  # (B, S, D) -> (B, H, S, hd)
        return t.reshape(B, S, NHEAD, HEAD_DIM).transpose(0, 2, 1, 3)

    qh, kh, vh = split_heads(q), split_heads(k), split_heads(v)
    scores = jnp.einsum("bhqd,bhkd->bhqk", qh, kh) / math.sqrt(HEAD_DIM)
    p = jax.nn.softmax(scores, axis=-1)
    o = jnp.einsum("bhqk,bhkd->bhqd", p, vh).transpose(0, 2, 1, 3).reshape(B, S, D)
    attn = o @ params["wo_t"] + params["bo"]

    def ln(t, g, b):
        mu = jnp.mean(t, axis=-1, keepdims=True)
        var = jnp.mean((t - mu) ** 2, axis=-1, keepdims=True)
        return (t - mu) / jnp.sqrt(var + LN_EPS) * g + b

    x1 = ln(x + attn, params["g1"], params["be1"])
    ff = jnp.maximum(x1 @ params["w1_t"] + params["b1"], 0.0) @ params["w2_t"] + params["b2"]
    x2 = ln(x1 + ff, params["g2"], params["be2"])
    return jnp.transpose(x2, (1, 0, 2))


# ------------------------------- main -----------------------------------------
if __name__ == "__main__":
    key = jax.random.PRNGKey(0)
    keys = jax.random.split(key, 12)

    def w(k, shape, scale=0.05):
        return (scale * jax.random.normal(k, shape)).astype(jnp.float32)

    # nn.MultiheadAttention: in_proj_weight (3D, D), out_proj (D, D)
    # Pass transposed weights so the kernel does x @ W^T directly.
    params = {
        "wq_t": w(keys[0], (D_MODEL, D_MODEL)),
        "wk_t": w(keys[1], (D_MODEL, D_MODEL)),
        "wv_t": w(keys[2], (D_MODEL, D_MODEL)),
        "bq":   w(keys[3], (1, D_MODEL)),
        "bk":   w(keys[4], (1, D_MODEL)),
        "bv":   w(keys[5], (1, D_MODEL)),
        "wo_t": w(keys[6], (D_MODEL, D_MODEL)),
        "bo":   w(keys[7], (1, D_MODEL)),
        # linear1: (dim_ff, d_model) in torch -> transposed (d_model, dim_ff)
        "w1_t": w(keys[8], (D_MODEL, DIM_FF)),
        "b1":   w(keys[9], (1, DIM_FF)),
        # linear2: (d_model, dim_ff) in torch -> transposed (dim_ff, d_model)
        "w2_t": w(keys[10], (DIM_FF, D_MODEL)),
        "b2":   w(keys[11], (1, D_MODEL)),
        "g1":  jnp.ones((1, D_MODEL), jnp.float32),
        "be1": jnp.zeros((1, D_MODEL), jnp.float32),
        "g2":  jnp.ones((1, D_MODEL), jnp.float32),
        "be2": jnp.zeros((1, D_MODEL), jnp.float32),
    }

    dkey = jax.random.split(jax.random.PRNGKey(0), 2)
    src = jax.random.normal(dkey[0], (SEQ, BATCH, D_MODEL), jnp.float32)
    pos = jax.random.normal(dkey[1], (SEQ, BATCH, D_MODEL), jnp.float32)

    out = transformer_encoder_layer(src, pos, params)
    out = jax.block_until_ready(out)

    ref = reference(src, pos, params)
    assert out.shape == (SEQ, BATCH, D_MODEL)
    assert jnp.allclose(out, ref, rtol=2e-3, atol=2e-3), (
        f"max abs diff = {float(jnp.max(jnp.abs(out - ref)))}")

    print("KERNEL_OK")
</pallas_src>

<mosaic_0001>
module attributes {stable_mosaic.version = 11 : i64} {
  func.func @_encoder_layer_kernel(%arg0: i32, %arg1: memref<16x32xf32, #tpu.memory_space<vmem>>, %arg2: memref<16x32xf32, #tpu.memory_space<vmem>>, %arg3: memref<32x64xf32, #tpu.memory_space<vmem>>, %arg4: memref<1x64xf32, #tpu.memory_space<vmem>>, %arg5: memref<32x32xf32, #tpu.memory_space<vmem>>, %arg6: memref<1x32xf32, #tpu.memory_space<vmem>>, %arg7: memref<32x32xf32, #tpu.memory_space<vmem>>, %arg8: memref<1x32xf32, #tpu.memory_space<vmem>>, %arg9: memref<32x64xf32, #tpu.memory_space<vmem>>, %arg10: memref<1x64xf32, #tpu.memory_space<vmem>>, %arg11: memref<64x32xf32, #tpu.memory_space<vmem>>, %arg12: memref<1x32xf32, #tpu.memory_space<vmem>>, %arg13: memref<1x32xf32, #tpu.memory_space<vmem>>, %arg14: memref<1x32xf32, #tpu.memory_space<vmem>>, %arg15: memref<1x32xf32, #tpu.memory_space<vmem>>, %arg16: memref<1x32xf32, #tpu.memory_space<vmem>>, %arg17: memref<16x32xf32, #tpu.memory_space<vmem>>) attributes {dimension_semantics = [#tpu.dimension_semantics<arbitrary>], iteration_bounds = array<i64: 1>, scalar_prefetch = 0 : i64, scratch_operands = 0 : i64, tpu.core_type = #tpu.core_type<tc>, window_params = [{pipeline_mode = #tpu.pipeline_mode<synchronous>, transform_indices = @transform_0, window_bounds = array<i64: 16, 32>}, {pipeline_mode = #tpu.pipeline_mode<synchronous>, transform_indices = @transform_1, window_bounds = array<i64: 16, 32>}, {pipeline_mode = #tpu.pipeline_mode<synchronous>, transform_indices = @transform_2, window_bounds = array<i64: 32, 64>}, {pipeline_mode = #tpu.pipeline_mode<synchronous>, transform_indices = @transform_3, window_bounds = array<i64: 1, 64>}, {pipeline_mode = #tpu.pipeline_mode<synchronous>, transform_indices = @transform_4, window_bounds = array<i64: 32, 32>}, {pipeline_mode = #tpu.pipeline_mode<synchronous>, transform_indices = @transform_5, window_bounds = array<i64: 1, 32>}, {pipeline_mode = #tpu.pipeline_mode<synchronous>, transform_indices = @transform_6, window_bounds = array<i64: 32, 32>}, {pipeline_mode = #tpu.pipeline_mode<synchronous>, transform_indices = @transform_7, window_bounds = array<i64: 1, 32>}, {pipeline_mode = #tpu.pipeline_mode<synchronous>, transform_indices = @transform_8, window_bounds = array<i64: 32, 64>}, {pipeline_mode = #tpu.pipeline_mode<synchronous>, transform_indices = @transform_9, window_bounds = array<i64: 1, 64>}, {pipeline_mode = #tpu.pipeline_mode<synchronous>, transform_indices = @transform_10, window_bounds = array<i64: 64, 32>}, {pipeline_mode = #tpu.pipeline_mode<synchronous>, transform_indices = @transform_11, window_bounds = array<i64: 1, 32>}, {pipeline_mode = #tpu.pipeline_mode<synchronous>, transform_indices = @transform_12, window_bounds = array<i64: 1, 32>}, {pipeline_mode = #tpu.pipeline_mode<synchronous>, transform_indices = @transform_13, window_bounds = array<i64: 1, 32>}, {pipeline_mode = #tpu.pipeline_mode<synchronous>, transform_indices = @transform_14, window_bounds = array<i64: 1, 32>}, {pipeline_mode = #tpu.pipeline_mode<synchronous>, transform_indices = @transform_15, window_bounds = array<i64: 1, 32>}, {pipeline_mode = #tpu.pipeline_mode<synchronous>, transform_indices = @transform_16, window_bounds = array<i64: 16, 32>}]} {
    %c0 = arith.constant 0 : index
    %c0_0 = arith.constant 0 : index
    %0 = vector.load %arg1[%c0, %c0_0] : memref<16x32xf32, #tpu.memory_space<vmem>>, vector<16x32xf32>
    %c0_1 = arith.constant 0 : index
    %c0_2 = arith.constant 0 : index
    %1 = vector.load %arg2[%c0_1, %c0_2] : memref<16x32xf32, #tpu.memory_space<vmem>>, vector<16x32xf32>
    %2 = arith.addf %0, %1 : vector<16x32xf32>
    %c0_3 = arith.constant 0 : index
    %c0_4 = arith.constant 0 : index
    %3 = vector.load %arg3[%c0_3, %c0_4] : memref<32x64xf32, #tpu.memory_space<vmem>>, vector<32x64xf32>
    %cst = arith.constant dense<0.000000e+00> : vector<16x64xf32>
    %4 = tpu.matmul %2, %3, %cst {dimension_numbers = #tpu.dot_dimension_numbers<[1], [0], [0], [1], [0, 0, 1, 1], [], []>} : vector<16x32xf32>, vector<32x64xf32>, vector<16x64xf32> -> vector<16x64xf32>
    %c0_5 = arith.constant 0 : index
    %c0_6 = arith.constant 0 : index
    %5 = vector.load %arg4[%c0_5, %c0_6] : memref<1x64xf32, #tpu.memory_space<vmem>>, vector<1x64xf32>
    %6 = vector.broadcast %5 : vector<1x64xf32> to vector<16x64xf32>
    %7 = arith.addf %4, %6 : vector<16x64xf32>
    %c0_7 = arith.constant 0 : index
    %c0_8 = arith.constant 0 : index
    %8 = vector.load %arg5[%c0_7, %c0_8] : memref<32x32xf32, #tpu.memory_space<vmem>>, vector<32x32xf32>
    %cst_9 = arith.constant dense<0.000000e+00> : vector<16x32xf32>
    %9 = tpu.matmul %0, %8, %cst_9 {dimension_numbers = #tpu.dot_dimension_numbers<[1], [0], [0], [1], [0, 0, 1, 1], [], []>} : vector<16x32xf32>, vector<32x32xf32>, vector<16x32xf32> -> vector<16x32xf32>
    %c0_10 = arith.constant 0 : index
    %c0_11 = arith.constant 0 : index
    %10 = vector.load %arg6[%c0_10, %c0_11] : memref<1x32xf32, #tpu.memory_space<vmem>>, vector<1x32xf32>
    %11 = vector.broadcast %10 : vector<1x32xf32> to vector<16x32xf32>
    %12 = arith.addf %9, %11 : vector<16x32xf32>
    %13 = vector.extract_strided_slice %7 {offsets = [0, 0], sizes = [16, 32], strides = [1, 1]} : vector<16x64xf32> to vector<16x32xf32>
    %14 = vector.extract_strided_slice %7 {offsets = [0, 32], sizes = [16, 32], strides = [1, 1]} : vector<16x64xf32> to vector<16x32xf32>
    %15 = tpu.iota {dimensions = array<i32: 0>} : vector<16x16xi32>
    %16 = tpu.iota {dimensions = array<i32: 1>} : vector<16x16xi32>
    %c2_i32 = arith.constant 2 : i32
    %c0_i32 = arith.constant 0 : i32
    %17 = arith.cmpi eq, %c2_i32, %c0_i32 : i32
    %c1_i32 = arith.constant 1 : i32
    %18 = arith.select %17, %c1_i32, %c2_i32 : i32
    %19 = vector.broadcast %18 : i32 to vector<16x16xi32>
    %20 = arith.remsi %15, %19 : vector<16x16xi32>
    %c0_i32_12 = arith.constant 0 : i32
    %21 = vector.broadcast %c0_i32_12 : i32 to vector<16x16xi32>
    %22 = arith.cmpi ne, %20, %21 : vector<16x16xi32>
    %c0_i32_13 = arith.constant 0 : i32
    %23 = vector.broadcast %c0_i32_13 : i32 to vector<16x16xi32>
    %24 = arith.cmpi slt, %20, %23 : vector<16x16xi32>
    %c0_i32_14 = arith.constant 0 : i32
    %25 = arith.cmpi slt, %18, %c0_i32_14 : i32
    %26 = vector.broadcast %25 : i1 to vector<16x16xi1>
    %27 = vector.broadcast %26 : vector<16x16xi1> to vector<16x16xi1>
    %28 = arith.xori %24, %27 : vector<16x16xi1>
    %29 = arith.andi %28, %22 : vector<16x16xi1>
    %30 = vector.broadcast %18 : i32 to vector<16x16xi32>
    %31 = arith.addi %20, %30 : vector<16x16xi32>
    %32 = arith.select %29, %31, %20 : vector<16x16xi1>, vector<16x16xi32>
    %c2_i32_15 = arith.constant 2 : i32
    %c0_i32_16 = arith.constant 0 : i32
    %33 = arith.cmpi eq, %c2_i32_15, %c0_i32_16 : i32
    %c1_i32_17 = arith.constant 1 : i32
    %34 = arith.select %33, %c1_i32_17, %c2_i32_15 : i32
    %35 = vector.broadcast %34 : i32 to vector<16x16xi32>
    %36 = arith.remsi %16, %35 : vector<16x16xi32>
    %c0_i32_18 = arith.constant 0 : i32
    %37 = vector.broadcast %c0_i32_18 : i32 to vector<16x16xi32>
    %38 = arith.cmpi ne, %36, %37 : vector<16x16xi32>
    %c0_i32_19 = arith.constant 0 : i32
    %39 = vector.broadcast %c0_i32_19 : i32 to vector<16x16xi32>
    %40 = arith.cmpi slt, %36, %39 : vector<16x16xi32>
    %c0_i32_20 = arith.constant 0 : i32
    %41 = arith.cmpi slt, %34, %c0_i32_20 : i32
    %42 = vector.broadcast %41 : i1 to vector<16x16xi1>
    %43 = vector.broadcast %42 : vector<16x16xi1> to vector<16x16xi1>
    %44 = arith.xori %40, %43 : vector<16x16xi1>
    %45 = arith.andi %44, %38 : vector<16x16xi1>
    %46 = vector.broadcast %34 : i32 to vector<16x16xi32>
    %47 = arith.addi %36, %46 : vector<16x16xi32>
    %48 = arith.select %45, %47, %36 : vector<16x16xi1>, vector<16x16xi32>
    %49 = arith.cmpi eq, %32, %48 : vector<16x16xi32>
    %c0_21 = arith.constant 0 : index
    %c0_22 = arith.constant 0 : index
    %50 = vector.load %arg7[%c0_21, %c0_22] : memref<32x32xf32, #tpu.memory_space<vmem>>, vector<32x32xf32>
    %cst_23 = arith.constant 0.000000e+00 : f32
    %51 = vector.broadcast %cst_23 : f32 to vector<16x32xf32>
    %52 = vector.extract_strided_slice %13 {offsets = [0, 0], sizes = [16, 8], strides = [1, 1]} : vector<16x32xf32> to vector<16x8xf32>
    %53 = vector.extract_strided_slice %14 {offsets = [0, 0], sizes = [16, 8], strides = [1, 1]} : vector<16x32xf32> to vector<16x8xf32>
    %54 = tpu.transpose %53, [1, 0] : vector<16x8xf32> -> vector<8x16xf32>
    %cst_24 = arith.constant dense<0.000000e+00> : vector<16x16xf32>
    %55 = tpu.matmul %52, %54, %cst_24 {dimension_numbers = #tpu.dot_dimension_numbers<[1], [0], [0], [1], [0, 0, 1, 1], [], []>} : vector<16x8xf32>, vector<8x16xf32>, vector<16x16xf32> -> vector<16x16xf32>
    %cst_25 = arith.constant -1.000000e+30 : f32
    %56 = vector.broadcast %cst_25 : f32 to vector<16x16xf32>
    %57 = arith.select %49, %55, %56 : vector<16x16xi1>, vector<16x16xf32>
    %cst_26 = arith.constant dense<0xFF800000> : vector<16xf32>
    %58 = vector.multi_reduction <maximumf>, %57, %cst_26 [1] : vector<16x16xf32> to vector<16xf32>
    %59 = vector.shape_cast %58 : vector<16xf32> to vector<16x1xf32>
    %60 = vector.broadcast %59 : vector<16x1xf32> to vector<16x16xf32>
    %61 = arith.subf %57, %60 : vector<16x16xf32>
    %62 = math.exp %61 : vector<16x16xf32>
    %cst_27 = arith.constant dense<0.000000e+00> : vector<16xf32>
    %63 = vector.multi_reduction <add>, %62, %cst_27 [1] : vector<16x16xf32> to vector<16xf32>
    %64 = vector.shape_cast %63 : vector<16xf32> to vector<16x1xf32>
    %65 = tpu.reciprocal %64 {approx = true} : vector<16x1xf32> -> vector<16x1xf32>
    %66 = vector.broadcast %65 : vector<16x1xf32> to vector<16x16xf32>
    %67 = arith.mulf %62, %66 : vector<16x16xf32>
    %68 = vector.extract_strided_slice %12 {offsets = [0, 0], sizes = [16, 8], strides = [1, 1]} : vector<16x32xf32> to vector<16x8xf32>
    %cst_28 = arith.constant dense<0.000000e+00> : vector<16x8xf32>
    %69 = tpu.matmul %67, %68, %cst_28 {dimension_numbers = #tpu.dot_dimension_numbers<[1], [0], [0], [1], [0, 0, 1, 1], [], []>} : vector<16x16xf32>, vector<16x8xf32>, vector<16x8xf32> -> vector<16x8xf32>
    %70 = vector.extract_strided_slice %50 {offsets = [0, 0], sizes = [8, 32], strides = [1, 1]} : vector<32x32xf32> to vector<8x32xf32>
    %cst_29 = arith.constant dense<0.000000e+00> : vector<16x32xf32>
    %71 = tpu.matmul %69, %70, %cst_29 {dimension_numbers = #tpu.dot_dimension_numbers<[1], [0], [0], [1], [0, 0, 1, 1], [], []>} : vector<16x8xf32>, vector<8x32xf32>, vector<16x32xf32> -> vector<16x32xf32>
    %72 = arith.addf %51, %71 : vector<16x32xf32>
    %73 = vector.extract_strided_slice %13 {offsets = [0, 8], sizes = [16, 8], strides = [1, 1]} : vector<16x32xf32> to vector<16x8xf32>
    %74 = vector.extract_strided_slice %14 {offsets = [0, 8], sizes = [16, 8], strides = [1, 1]} : vector<16x32xf32> to vector<16x8xf32>
    %75 = tpu.transpose %74, [1, 0] : vector<16x8xf32> -> vector<8x16xf32>
    %cst_30 = arith.constant dense<0.000000e+00> : vector<16x16xf32>
    %76 = tpu.matmul %73, %75, %cst_30 {dimension_numbers = #tpu.dot_dimension_numbers<[1], [0], [0], [1], [0, 0, 1, 1], [], []>} : vector<16x8xf32>, vector<8x16xf32>, vector<16x16xf32> -> vector<16x16xf32>
    %cst_31 = arith.constant -1.000000e+30 : f32
    %77 = vector.broadcast %cst_31 : f32 to vector<16x16xf32>
    %78 = arith.select %49, %76, %77 : vector<16x16xi1>, vector<16x16xf32>
    %cst_32 = arith.constant dense<0xFF800000> : vector<16xf32>
    %79 = vector.multi_reduction <maximumf>, %78, %cst_32 [1] : vector<16x16xf32> to vector<16xf32>
    %80 = vector.shape_cast %79 : vector<16xf32> to vector<16x1xf32>
    %81 = vector.broadcast %80 : vector<16x1xf32> to vector<16x16xf32>
    %82 = arith.subf %78, %81 : vector<16x16xf32>
    %83 = math.exp %82 : vector<16x16xf32>
    %cst_33 = arith.constant dense<0.000000e+00> : vector<16xf32>
    %84 = vector.multi_reduction <add>, %83, %cst_33 [1] : vector<16x16xf32> to vector<16xf32>
    %85 = vector.shape_cast %84 : vector<16xf32> to vector<16x1xf32>
    %86 = tpu.reciprocal %85 {approx = true} : vector<16x1xf32> -> vector<16x1xf32>
    %87 = vector.broadcast %86 : vector<16x1xf32> to vector<16x16xf32>
    %88 = arith.mulf %83, %87 : vector<16x16xf32>
    %89 = vector.extract_strided_slice %12 {offsets = [0, 8], sizes = [16, 8], strides = [1, 1]} : vector<16x32xf32> to vector<16x8xf32>
    %cst_34 = arith.constant dense<0.000000e+00> : vector<16x8xf32>
    %90 = tpu.matmul %88, %89, %cst_34 {dimension_numbers = #tpu.dot_dimension_numbers<[1], [0], [0], [1], [0, 0, 1, 1], [], []>} : vector<16x16xf32>, vector<16x8xf32>, vector<16x8xf32> -> vector<16x8xf32>
    %91 = vector.extract_strided_slice %50 {offsets = [8, 0], sizes = [8, 32], strides = [1, 1]} : vector<32x32xf32> to vector<8x32xf32>
    %cst_35 = arith.constant dense<0.000000e+00> : vector<16x32xf32>
    %92 = tpu.matmul %90, %91, %cst_35 {dimension_numbers = #tpu.dot_dimension_numbers<[1], [0], [0], [1], [0, 0, 1, 1], [], []>} : vector<16x8xf32>, vector<8x32xf32>, vector<16x32xf32> -> vector<16x32xf32>
    %93 = arith.addf %72, %92 : vector<16x32xf32>
    %94 = vector.extract_strided_slice %13 {offsets = [0, 16], sizes = [16, 8], strides = [1, 1]} : vector<16x32xf32> to vector<16x8xf32>
    %95 = vector.extract_strided_slice %14 {offsets = [0, 16], sizes = [16, 8], strides = [1, 1]} : vector<16x32xf32> to vector<16x8xf32>
    %96 = tpu.transpose %95, [1, 0] : vector<16x8xf32> -> vector<8x16xf32>
    %cst_36 = arith.constant dense<0.000000e+00> : vector<16x16xf32>
    %97 = tpu.matmul %94, %96, %cst_36 {dimension_numbers = #tpu.dot_dimension_numbers<[1], [0], [0], [1], [0, 0, 1, 1], [], []>} : vector<16x8xf32>, vector<8x16xf32>, vector<16x16xf32> -> vector<16x16xf32>
    %cst_37 = arith.constant -1.000000e+30 : f32
    %98 = vector.broadcast %cst_37 : f32 to vector<16x16xf32>
    %99 = arith.select %49, %97, %98 : vector<16x16xi1>, vector<16x16xf32>
    %cst_38 = arith.constant dense<0xFF800000> : vector<16xf32>
    %100 = vector.multi_reduction <maximumf>, %99, %cst_38 [1] : vector<16x16xf32> to vector<16xf32>
    %101 = vector.shape_cast %100 : vector<16xf32> to vector<16x1xf32>
    %102 = vector.broadcast %101 : vector<16x1xf32> to vector<16x16xf32>
    %103 = arith.subf %99, %102 : vector<16x16xf32>
    %104 = math.exp %103 : vector<16x16xf32>
    %cst_39 = arith.constant dense<0.000000e+00> : vector<16xf32>
    %105 = vector.multi_reduction <add>, %104, %cst_39 [1] : vector<16x16xf32> to vector<16xf32>
    %106 = vector.shape_cast %105 : vector<16xf32> to vector<16x1xf32>
    %107 = tpu.reciprocal %106 {approx = true} : vector<16x1xf32> -> vector<16x1xf32>
    %108 = vector.broadcast %107 : vector<16x1xf32> to vector<16x16xf32>
    %109 = arith.mulf %104, %108 : vector<16x16xf32>
    %110 = vector.extract_strided_slice %12 {offsets = [0, 16], sizes = [16, 8], strides = [1, 1]} : vector<16x32xf32> to vector<16x8xf32>
    %cst_40 = arith.constant dense<0.000000e+00> : vector<16x8xf32>
    %111 = tpu.matmul %109, %110, %cst_40 {dimension_numbers = #tpu.dot_dimension_numbers<[1], [0], [0], [1], [0, 0, 1, 1], [], []>} : vector<16x16xf32>, vector<16x8xf32>, vector<16x8xf32> -> vector<16x8xf32>
    %112 = vector.extract_strided_slice %50 {offsets = [16, 0], sizes = [8, 32], strides = [1, 1]} : vector<32x32xf32> to vector<8x32xf32>
    %cst_41 = arith.constant dense<0.000000e+00> : vector<16x32xf32>
    %113 = tpu.matmul %111, %112, %cst_41 {dimension_numbers = #tpu.dot_dimension_numbers<[1], [0], [0], [1], [0, 0, 1, 1], [], []>} : vector<16x8xf32>, vector<8x32xf32>, vector<16x32xf32> -> vector<16x32xf32>
    %114 = arith.addf %93, %113 : vector<16x32xf32>
    %115 = vector.extract_strided_slice %13 {offsets = [0, 24], sizes = [16, 8], strides = [1, 1]} : vector<16x32xf32> to vector<16x8xf32>
    %116 = vector.extract_strided_slice %14 {offsets = [0, 24], sizes = [16, 8], strides = [1, 1]} : vector<16x32xf32> to vector<16x8xf32>
    %117 = tpu.transpose %116, [1, 0] : vector<16x8xf32> -> vector<8x16xf32>
    %cst_42 = arith.constant dense<0.000000e+00> : vector<16x16xf32>
    %118 = tpu.matmul %115, %117, %cst_42 {dimension_numbers = #tpu.dot_dimension_numbers<[1], [0], [0], [1], [0, 0, 1, 1], [], []>} : vector<16x8xf32>, vector<8x16xf32>, vector<16x16xf32> -> vector<16x16xf32>
    %cst_43 = arith.constant -1.000000e+30 : f32
    %119 = vector.broadcast %cst_43 : f32 to vector<16x16xf32>
    %120 = arith.select %49, %118, %119 : vector<16x16xi1>, vector<16x16xf32>
    %cst_44 = arith.constant dense<0xFF800000> : vector<16xf32>
    %121 = vector.multi_reduction <maximumf>, %120, %cst_44 [1] : vector<16x16xf32> to vector<16xf32>
    %122 = vector.shape_cast %121 : vector<16xf32> to vector<16x1xf32>
    %123 = vector.broadcast %122 : vector<16x1xf32> to vector<16x16xf32>
    %124 = arith.subf %120, %123 : vector<16x16xf32>
    %125 = math.exp %124 : vector<16x16xf32>
    %cst_45 = arith.constant dense<0.000000e+00> : vector<16xf32>
    %126 = vector.multi_reduction <add>, %125, %cst_45 [1] : vector<16x16xf32> to vector<16xf32>
    %127 = vector.shape_cast %126 : vector<16xf32> to vector<16x1xf32>
    %128 = tpu.reciprocal %127 {approx = true} : vector<16x1xf32> -> vector<16x1xf32>
    %129 = vector.broadcast %128 : vector<16x1xf32> to vector<16x16xf32>
    %130 = arith.mulf %125, %129 : vector<16x16xf32>
    %131 = vector.extract_strided_slice %12 {offsets = [0, 24], sizes = [16, 8], strides = [1, 1]} : vector<16x32xf32> to vector<16x8xf32>
    %cst_46 = arith.constant dense<0.000000e+00> : vector<16x8xf32>
    %132 = tpu.matmul %130, %131, %cst_46 {dimension_numbers = #tpu.dot_dimension_numbers<[1], [0], [0], [1], [0, 0, 1, 1], [], []>} : vector<16x16xf32>, vector<16x8xf32>, vector<16x8xf32> -> vector<16x8xf32>
    %133 = vector.extract_strided_slice %50 {offsets = [24, 0], sizes = [8, 32], strides = [1, 1]} : vector<32x32xf32> to vector<8x32xf32>
    %cst_47 = arith.constant dense<0.000000e+00> : vector<16x32xf32>
    %134 = tpu.matmul %132, %133, %cst_47 {dimension_numbers = #tpu.dot_dimension_numbers<[1], [0], [0], [1], [0, 0, 1, 1], [], []>} : vector<16x8xf32>, vector<8x32xf32>, vector<16x32xf32> -> vector<16x32xf32>
    %135 = arith.addf %114, %134 : vector<16x32xf32>
    %c0_48 = arith.constant 0 : index
    %c0_49 = arith.constant 0 : index
    %136 = vector.load %arg8[%c0_48, %c0_49] : memref<1x32xf32, #tpu.memory_space<vmem>>, vector<1x32xf32>
    %137 = vector.broadcast %136 : vector<1x32xf32> to vector<16x32xf32>
    %138 = arith.addf %135, %137 : vector<16x32xf32>
    %139 = arith.addf %0, %138 : vector<16x32xf32>
    %cst_50 = arith.constant dense<0.000000e+00> : vector<16xf32>
    %140 = vector.multi_reduction <add>, %139, %cst_50 [1] : vector<16x32xf32> to vector<16xf32>
    %141 = vector.shape_cast %140 : vector<16xf32> to vector<16x1xf32>
    %cst_51 = arith.constant 3.200000e+01 : f32
    %142 = vector.broadcast %cst_51 : f32 to vector<16x1xf32>
    %143 = arith.divf %141, %142 : vector<16x1xf32>
    %144 = vector.broadcast %143 : vector<16x1xf32> to vector<16x32xf32>
    %145 = arith.subf %139, %144 : vector<16x32xf32>
    %146 = arith.mulf %145, %145 : vector<16x32xf32>
    %cst_52 = arith.constant dense<0.000000e+00> : vector<16xf32>
    %147 = vector.multi_reduction <add>, %146, %cst_52 [1] : vector<16x32xf32> to vector<16xf32>
    %148 = vector.shape_cast %147 : vector<16xf32> to vector<16x1xf32>
    %cst_53 = arith.constant 3.200000e+01 : f32
    %149 = vector.broadcast %cst_53 : f32 to vector<16x1xf32>
    %150 = arith.divf %148, %149 : vector<16x1xf32>
    %151 = vector.broadcast %143 : vector<16x1xf32> to vector<16x32xf32>
    %152 = arith.subf %139, %151 : vector<16x32xf32>
    %cst_54 = arith.constant 9.99999974E-6 : f32
    %153 = vector.broadcast %cst_54 : f32 to vector<16x1xf32>
    %154 = arith.addf %150, %153 : vector<16x1xf32>
    %155 = math.rsqrt %154 : vector<16x1xf32>
    %156 = vector.broadcast %155 : vector<16x1xf32> to vector<16x32xf32>
    %157 = arith.mulf %152, %156 : vector<16x32xf32>
    %c0_55 = arith.constant 0 : index
    %c0_56 = arith.constant 0 : index
    %158 = vector.load %arg13[%c0_55, %c0_56] : memref<1x32xf32, #tpu.memory_space<vmem>>, vector<1x32xf32>
    %159 = vector.broadcast %158 : vector<1x32xf32> to vector<16x32xf32>
    %160 = arith.mulf %157, %159 : vector<16x32xf32>
    %c0_57 = arith.constant 0 : index
    %c0_58 = arith.constant 0 : index
    %161 = vector.load %arg14[%c0_57, %c0_58] : memref<1x32xf32, #tpu.memory_space<vmem>>, vector<1x32xf32>
    %162 = vector.broadcast %161 : vector<1x32xf32> to vector<16x32xf32>
    %163 = arith.addf %160, %162 : vector<16x32xf32>
    %c0_59 = arith.constant 0 : index
    %c0_60 = arith.constant 0 : index
    %164 = vector.load %arg9[%c0_59, %c0_60] : memref<32x64xf32, #tpu.memory_space<vmem>>, vector<32x64xf32>
    %cst_61 = arith.constant dense<0.000000e+00> : vector<16x64xf32>
    %165 = tpu.matmul %163, %164, %cst_61 {dimension_numbers = #tpu.dot_dimension_numbers<[1], [0], [0], [1], [0, 0, 1, 1], [], []>} : vector<16x32xf32>, vector<32x64xf32>, vector<16x64xf32> -> vector<16x64xf32>
    %c0_62 = arith.constant 0 : index
    %c0_63 = arith.constant 0 : index
    %166 = vector.load %arg10[%c0_62, %c0_63] : memref<1x64xf32, #tpu.memory_space<vmem>>, vector<1x64xf32>
    %167 = vector.broadcast %166 : vector<1x64xf32> to vector<16x64xf32>
    %168 = arith.addf %165, %167 : vector<16x64xf32>
    %cst_64 = arith.constant 0.000000e+00 : f32
    %169 = vector.broadcast %cst_64 : f32 to vector<16x64xf32>
    %170 = arith.maximumf %168, %169 : vector<16x64xf32>
    %c0_65 = arith.constant 0 : index
    %c0_66 = arith.constant 0 : index
    %171 = vector.load %arg11[%c0_65, %c0_66] : memref<64x32xf32, #tpu.memory_space<vmem>>, vector<64x32xf32>
    %cst_67 = arith.constant dense<0.000000e+00> : vector<16x32xf32>
    %172 = tpu.matmul %170, %171, %cst_67 {dimension_numbers = #tpu.dot_dimension_numbers<[1], [0], [0], [1], [0, 0, 1, 1], [], []>} : vector<16x64xf32>, vector<64x32xf32>, vector<16x32xf32> -> vector<16x32xf32>
    %c0_68 = arith.constant 0 : index
    %c0_69 = arith.constant 0 : index
    %173 = vector.load %arg12[%c0_68, %c0_69] : memref<1x32xf32, #tpu.memory_space<vmem>>, vector<1x32xf32>
    %174 = vector.broadcast %173 : vector<1x32xf32> to vector<16x32xf32>
    %175 = arith.addf %172, %174 : vector<16x32xf32>
    %176 = arith.addf %163, %175 : vector<16x32xf32>
    %cst_70 = arith.constant dense<0.000000e+00> : vector<16xf32>
    %177 = vector.multi_reduction <add>, %176, %cst_70 [1] : vector<16x32xf32> to vector<16xf32>
    %178 = vector.shape_cast %177 : vector<16xf32> to vector<16x1xf32>
    %cst_71 = arith.constant 3.200000e+01 : f32
    %179 = vector.broadcast %cst_71 : f32 to vector<16x1xf32>
    %180 = arith.divf %178, %179 : vector<16x1xf32>
    %181 = vector.broadcast %180 : vector<16x1xf32> to vector<16x32xf32>
    %182 = arith.subf %176, %181 : vector<16x32xf32>
    %183 = arith.mulf %182, %182 : vector<16x32xf32>
    %cst_72 = arith.constant dense<0.000000e+00> : vector<16xf32>
    %184 = vector.multi_reduction <add>, %183, %cst_72 [1] : vector<16x32xf32> to vector<16xf32>
    %185 = vector.shape_cast %184 : vector<16xf32> to vector<16x1xf32>
    %cst_73 = arith.constant 3.200000e+01 : f32
    %186 = vector.broadcast %cst_73 : f32 to vector<16x1xf32>
    %187 = arith.divf %185, %186 : vector<16x1xf32>
    %188 = vector.broadcast %180 : vector<16x1xf32> to vector<16x32xf32>
    %189 = arith.subf %176, %188 : vector<16x32xf32>
    %cst_74 = arith.constant 9.99999974E-6 : f32
    %190 = vector.broadcast %cst_74 : f32 to vector<16x1xf32>
    %191 = arith.addf %187, %190 : vector<16x1xf32>
    %192 = math.rsqrt %191 : vector<16x1xf32>
    %193 = vector.broadcast %192 : vector<16x1xf32> to vector<16x32xf32>
    %194 = arith.mulf %189, %193 : vector<16x32xf32>
    %c0_75 = arith.constant 0 : index
    %c0_76 = arith.constant 0 : index
    %195 = vector.load %arg15[%c0_75, %c0_76] : memref<1x32xf32, #tpu.memory_space<vmem>>, vector<1x32xf32>
    %196 = vector.broadcast %195 : vector<1x32xf32> to vector<16x32xf32>
    %197 = arith.mulf %194, %196 : vector<16x32xf32>
    %c0_77 = arith.constant 0 : index
    %c0_78 = arith.constant 0 : index
    %198 = vector.load %arg16[%c0_77, %c0_78] : memref<1x32xf32, #tpu.memory_space<vmem>>, vector<1x32xf32>
    %199 = vector.broadcast %198 : vector<1x32xf32> to vector<16x32xf32>
    %200 = arith.addf %197, %199 : vector<16x32xf32>
    %c0_79 = arith.constant 0 : index
    %c0_80 = arith.constant 0 : index
    %201 = vector.load %arg17[%c0_79, %c0_80] : memref<16x32xf32, #tpu.memory_space<vmem>>, vector<16x32xf32>
    tpu.vector_store %arg17[%c0_79, %c0_80], %200 {strides = array<i32>} : memref<16x32xf32, #tpu.memory_space<vmem>>, vector<16x32xf32>,
    return
  }
  func.func @transform_0(%arg0: i32) -> (i32, i32) {
    %c0_i32 = arith.constant 0 : i32
    %c0_i32_0 = arith.constant 0 : i32
    %c0_i32_1 = arith.constant 0 : i32
    return %c0_i32, %c0_i32_0 : i32, i32
  }
  func.func @transform_1(%arg0: i32) -> (i32, i32) {
    %c0_i32 = arith.constant 0 : i32
    %c0_i32_0 = arith.constant 0 : i32
    %c0_i32_1 = arith.constant 0 : i32
    return %c0_i32, %c0_i32_0 : i32, i32
  }
  func.func @transform_2(%arg0: i32) -> (i32, i32) {
    %c0_i32 = arith.constant 0 : i32
    %c0_i32_0 = arith.constant 0 : i32
    %c0_i32_1 = arith.constant 0 : i32
    return %c0_i32, %c0_i32_0 : i32, i32
  }
  func.func @transform_3(%arg0: i32) -> (i32, i32) {
    %c0_i32 = arith.constant 0 : i32
    %c0_i32_0 = arith.constant 0 : i32
    %c0_i32_1 = arith.constant 0 : i32
    return %c0_i32, %c0_i32_0 : i32, i32
  }
  func.func @transform_4(%arg0: i32) -> (i32, i32) {
    %c0_i32 = arith.constant 0 : i32
    %c0_i32_0 = arith.constant 0 : i32
    %c0_i32_1 = arith.constant 0 : i32
    return %c0_i32, %c0_i32_0 : i32, i32
  }
  func.func @transform_5(%arg0: i32) -> (i32, i32) {
    %c0_i32 = arith.constant 0 : i32
    %c0_i32_0 = arith.constant 0 : i32
    %c0_i32_1 = arith.constant 0 : i32
    return %c0_i32, %c0_i32_0 : i32, i32
  }
  func.func @transform_6(%arg0: i32) -> (i32, i32) {
    %c0_i32 = arith.constant 0 : i32
    %c0_i32_0 = arith.constant 0 : i32
    %c0_i32_1 = arith.constant 0 : i32
    return %c0_i32, %c0_i32_0 : i32, i32
  }
  func.func @transform_7(%arg0: i32) -> (i32, i32) {
    %c0_i32 = arith.constant 0 : i32
    %c0_i32_0 = arith.constant 0 : i32
    %c0_i32_1 = arith.constant 0 : i32
    return %c0_i32, %c0_i32_0 : i32, i32
  }
  func.func @transform_8(%arg0: i32) -> (i32, i32) {
    %c0_i32 = arith.constant 0 : i32
    %c0_i32_0 = arith.constant 0 : i32
    %c0_i32_1 = arith.constant 0 : i32
    return %c0_i32, %c0_i32_0 : i32, i32
  }
  func.func @transform_9(%arg0: i32) -> (i32, i32) {
    %c0_i32 = arith.constant 0 : i32
    %c0_i32_0 = arith.constant 0 : i32
    %c0_i32_1 = arith.constant 0 : i32
    return %c0_i32, %c0_i32_0 : i32, i32
  }
  func.func @transform_10(%arg0: i32) -> (i32, i32) {
    %c0_i32 = arith.constant 0 : i32
    %c0_i32_0 = arith.constant 0 : i32
    %c0_i32_1 = arith.constant 0 : i32
    return %c0_i32, %c0_i32_0 : i32, i32
  }
  func.func @transform_11(%arg0: i32) -> (i32, i32) {
    %c0_i32 = arith.constant 0 : i32
    %c0_i32_0 = arith.constant 0 : i32
    %c0_i32_1 = arith.constant 0 : i32
    return %c0_i32, %c0_i32_0 : i32, i32
  }
  func.func @transform_12(%arg0: i32) -> (i32, i32) {
    %c0_i32 = arith.constant 0 : i32
    %c0_i32_0 = arith.constant 0 : i32
    %c0_i32_1 = arith.constant 0 : i32
    return %c0_i32, %c0_i32_0 : i32, i32
  }
  func.func @transform_13(%arg0: i32) -> (i32, i32) {
    %c0_i32 = arith.constant 0 : i32
    %c0_i32_0 = arith.constant 0 : i32
    %c0_i32_1 = arith.constant 0 : i32
    return %c0_i32, %c0_i32_0 : i32, i32
  }
  func.func @transform_14(%arg0: i32) -> (i32, i32) {
    %c0_i32 = arith.constant 0 : i32
    %c0_i32_0 = arith.constant 0 : i32
    %c0_i32_1 = arith.constant 0 : i32
    return %c0_i32, %c0_i32_0 : i32, i32
  }
  func.func @transform_15(%arg0: i32) -> (i32, i32) {
    %c0_i32 = arith.constant 0 : i32
    %c0_i32_0 = arith.constant 0 : i32
    %c0_i32_1 = arith.constant 0 : i32
    return %c0_i32, %c0_i32_0 : i32, i32
  }
  func.func @transform_16(%arg0: i32) -> (i32, i32) {
    %c0_i32 = arith.constant 0 : i32
    %c0_i32_0 = arith.constant 0 : i32
    %c0_i32_1 = arith.constant 0 : i32
    return %c0_i32, %c0_i32_0 : i32, i32
  }
}

</mosaic_0001>

<llo_original>
// kernel: tpu_custom_call.1
$region0: #{tpu_custom_call.1}
  #allocation0 [shape = 'u32[]', space=smem, size = 0x4, offset = 0x4, fixed_abs, tag = 'smem constant byte address 0x4 - core index']
  #allocation1 [shape = 'u32[144,128]{1,0:T(1,128)}', space=vmem, size = 0x12000, scoped, tag = 'internal scratch']
  %s0 = inlined_call_operand.hbm [shape: f32[16,32], index: 0, kind: input, shape index: {}]
  %s1 = inlined_call_operand.hbm [shape: f32[16,32], index: 1, kind: input, shape index: {}]
  %s2 = inlined_call_operand.vmem [shape: f32[32,64], index: 2, kind: input, shape index: {}]
  %s3 = inlined_call_operand.vmem [shape: f32[1,64], index: 3, kind: input, shape index: {}]
  %s4 = inlined_call_operand.vmem [shape: f32[32,32], index: 4, kind: input, shape index: {}]
  %s5 = inlined_call_operand.vmem [shape: f32[1,32], index: 5, kind: input, shape index: {}]
  %s6 = inlined_call_operand.vmem [shape: f32[32,32], index: 6, kind: input, shape index: {}]
  %s7 = inlined_call_operand.vmem [shape: f32[1,32], index: 7, kind: input, shape index: {}]
  %s8 = inlined_call_operand.hbm [shape: f32[32,64], index: 8, kind: input, shape index: {}]
  %s9 = inlined_call_operand.vmem [shape: f32[1,64], index: 9, kind: input, shape index: {}]
  %s10 = inlined_call_operand.vmem [shape: f32[64,32], index: 10, kind: input, shape index: {}]
  %s11 = inlined_call_operand.vmem [shape: f32[1,32], index: 11, kind: input, shape index: {}]
  %s12 = inlined_call_operand.vmem [shape: f32[1,32], index: 12, kind: input, shape index: {}]
  %s13 = inlined_call_operand.vmem [shape: f32[1,32], index: 13, kind: input, shape index: {}]
  %s14 = inlined_call_operand.vmem [shape: f32[1,32], index: 14, kind: input, shape index: {}]
  %s15 = inlined_call_operand.vmem [shape: f32[1,32], index: 15, kind: input, shape index: {}]
  %s16 = inlined_call_operand.hbm [shape: f32[16,32], index: 16, kind: output, shape index: {}]
  %s17 = sld [smem:[#allocation0]]
  $region86: #{tpu_custom_call.1} parent=0
    _
  %s19 = ssub.s32 1, %s17
  %s20 = scalar_select 0, %s19, %s17
  $region1: #{tpu_custom_call.1} parent=0
    #allocation2 [shape = 'u8[8192]{0}', space=vmem, size = 0x2000, scoped, tag = 'input window, operand 0, single buffered']
    #allocation3 [shape = 's32[1]{0}', space=sflag, size = 0x4, scoped, tag = 'scoped memory for tpu_custom_call.1']
    #allocation4 [shape = 's32[1]{0}', space=sflag, size = 0x4, scoped, tag = 'scoped memory for tpu_custom_call.1']
    #allocation5 [shape = 'u8[8192]{0}', space=vmem, size = 0x2000, scoped, tag = 'input window, operand 1, single buffered']
    #allocation6 [shape = 's32[1]{0}', space=sflag, size = 0x4, scoped, tag = 'scoped memory for tpu_custom_call.1']
    #allocation7 [shape = 'u8[16384]{0}', space=vmem, size = 0x4000, scoped, tag = 'input window, operand 8, single buffered']
    #allocation8 [shape = 'u8[8192]{0}', space=vmem, size = 0x2000, scoped, tag = 'output window, operand 0, single buffered']
    %21 = vsyncpa [#allocation3], 0
    %22 = vsyncpa [#allocation6], 0
    %23 = vsyncpa [#allocation4], 0
    // Predicated region
    $region2: #{tpu_custom_call.1} parent=1 // pred_check
      _
    $region3: #{tpu_custom_call.1} parent=1 // pred_check_branch
      %25 = sbr.rel (0) target = $region5
    $region4: #{tpu_custom_call.1} parent=1 // pred_region
      %s27 = ssub.s32 256, 256
      %28 = vsyncadd [#allocation3], %s27
      %s29 = sshll.u32 [#allocation2], 4
      %s30 = int_to_ptr.vmem [resolvable:$true] %s29
      %35 = dma.hbm_to_vmem [thread:$0]  %s0, 256, %s30, [#allocation3], 128, 128, 8
    $region5: #{tpu_custom_call.1} parent=1 // pred_fallthru
      _
    // Predicated region
    $region6: #{tpu_custom_call.1} parent=1 // pred_check
      _
    $region7: #{tpu_custom_call.1} parent=1 // pred_check_branch
      %37 = sbr.rel (0) target = $region9
    $region8: #{tpu_custom_call.1} parent=1 // pred_region
      %s39 = ssub.s32 256, 256
      %40 = vsyncadd [#allocation6], %s39
      %s41 = sshll.u32 [#allocation5], 4
      %s42 = int_to_ptr.vmem [resolvable:$true] %s41
      %47 = dma.hbm_to_vmem [thread:$0]  %s1, 256, %s42, [#allocation6], 128, 128, 8
    $region9: #{tpu_custom_call.1} parent=1 // pred_fallthru
      _
    // Predicated region
    $region10: #{tpu_custom_call.1} parent=1 // pred_check
      _
    $region11: #{tpu_custom_call.1} parent=1 // pred_check_branch
      %49 = sbr.rel (0) target = $region13
    $region12: #{tpu_custom_call.1} parent=1 // pred_region
      _
    $region13: #{tpu_custom_call.1} parent=1 // pred_fallthru
      _
    // Predicated region
    $region14: #{tpu_custom_call.1} parent=1 // pred_check
      _
    $region15: #{tpu_custom_call.1} parent=1 // pred_check_branch
      %51 = sbr.rel (0) target = $region17
    $region16: #{tpu_custom_call.1} parent=1 // pred_region
      _
    $region17: #{tpu_custom_call.1} parent=1 // pred_fallthru
      _
    // Predicated region
    $region18: #{tpu_custom_call.1} parent=1 // pred_check
      _
    $region19: #{tpu_custom_call.1} parent=1 // pred_check_branch
      %53 = sbr.rel (0) target = $region21
    $region20: #{tpu_custom_call.1} parent=1 // pred_region
      _
    $region21: #{tpu_custom_call.1} parent=1 // pred_fallthru
      _
    // Predicated region
    $region22: #{tpu_custom_call.1} parent=1 // pred_check
      _
    $region23: #{tpu_custom_call.1} parent=1 // pred_check_branch
      %55 = sbr.rel (0) target = $region25
    $region24: #{tpu_custom_call.1} parent=1 // pred_region
      _
    $region25: #{tpu_custom_call.1} parent=1 // pred_fallthru
      _
    // Predicated region
    $region26: #{tpu_custom_call.1} parent=1 // pred_check
      _
    $region27: #{tpu_custom_call.1} parent=1 // pred_check_branch
      %57 = sbr.rel (0) target = $region29
    $region28: #{tpu_custom_call.1} parent=1 // pred_region
      _
    $region29: #{tpu_custom_call.1} parent=1 // pred_fallthru
      _
    // Predicated region
    $region30: #{tpu_custom_call.1} parent=1 // pred_check
      _
    $region31: #{tpu_custom_call.1} parent=1 // pred_check_branch
      %59 = sbr.rel (0) target = $region33
    $region32: #{tpu_custom_call.1} parent=1 // pred_region
      _
    $region33: #{tpu_custom_call.1} parent=1 // pred_fallthru
      _
    // Predicated region
    $region34: #{tpu_custom_call.1} parent=1 // pred_check
      _
    $region35: #{tpu_custom_call.1} parent=1 // pred_check_branch
      %61 = sbr.rel (0) target = $region37
    $region36: #{tpu_custom_call.1} parent=1 // pred_region
      %s63 = ssub.s32 512, 512
      %64 = vsyncadd [#allocation6], %s63
      %s65 = sshll.u32 [#allocation7], 4
      %s66 = int_to_ptr.vmem [resolvable:$true] %s65
      %71 = dma.hbm_to_vmem [thread:$0]  %s8, 512, %s66, [#allocation6], 128, 128, 8
    $region37: #{tpu_custom_call.1} parent=1 // pred_fallthru
      _
    // Predicated region
    $region38: #{tpu_custom_call.1} parent=1 // pred_check
      _
    $region39: #{tpu_custom_call.1} parent=1 // pred_check_branch
      %73 = sbr.rel (0) target = $region41
    $region40: #{tpu_custom_call.1} parent=1 // pred_region
      _
    $region41: #{tpu_custom_call.1} parent=1 // pred_fallthru
      _
    // Predicated region
    $region42: #{tpu_custom_call.1} parent=1 // pred_check
      _
    $region43: #{tpu_custom_call.1} parent=1 // pred_check_branch
      %75 = sbr.rel (0) target = $region45
    $region44: #{tpu_custom_call.1} parent=1 // pred_region
      _
    $region45: #{tpu_custom_call.1} parent=1 // pred_fallthru
      _
    // Predicated region
    $region46: #{tpu_custom_call.1} parent=1 // pred_check
      _
    $region47: #{tpu_custom_call.1} parent=1 // pred_check_branch
      %77 = sbr.rel (0) target = $region49
    $region48: #{tpu_custom_call.1} parent=1 // pred_region
      _
    $region49: #{tpu_custom_call.1} parent=1 // pred_fallthru
      _
    // Predicated region
    $region50: #{tpu_custom_call.1} parent=1 // pred_check
      _
    $region51: #{tpu_custom_call.1} parent=1 // pred_check_branch
      %79 = sbr.rel (0) target = $region53
    $region52: #{tpu_custom_call.1} parent=1 // pred_region
      _
    $region53: #{tpu_custom_call.1} parent=1 // pred_fallthru
      _
    // Predicated region
    $region54: #{tpu_custom_call.1} parent=1 // pred_check
      _
    $region55: #{tpu_custom_call.1} parent=1 // pred_check_branch
      %81 = sbr.rel (0) target = $region57
    $region56: #{tpu_custom_call.1} parent=1 // pred_region
      _
    $region57: #{tpu_custom_call.1} parent=1 // pred_fallthru
      _
    // Predicated region
    $region58: #{tpu_custom_call.1} parent=1 // pred_check
      _
    $region59: #{tpu_custom_call.1} parent=1 // pred_check_branch
      %83 = sbr.rel (0) target = $region61
    $region60: #{tpu_custom_call.1} parent=1 // pred_region
      _
    $region61: #{tpu_custom_call.1} parent=1 // pred_fallthru
      _
    // Predicated region
    $region62: #{tpu_custom_call.1} parent=1 // pred_check
      _
    $region63: #{tpu_custom_call.1} parent=1 // pred_check_branch
      %85 = sbr.rel (0) target = $region65
    $region64: #{tpu_custom_call.1} parent=1 // pred_region
      _
    $region65: #{tpu_custom_call.1} parent=1 // pred_fallthru
      _
    // Predicated region
    $region66: #{tpu_custom_call.1} parent=1 // pred_check
      _
    $region67: #{tpu_custom_call.1} parent=1 // pred_check_branch
      %87 = sbr.rel (0) target = $region69
    $region68: #{tpu_custom_call.1} parent=1 // pred_region
      %88 = dma.done [#allocation3], 256
    $region69: #{tpu_custom_call.1} parent=1 // pred_fallthru
      _
    // Predicated region
    $region70: #{tpu_custom_call.1} parent=1 // pred_check
      _
    $region71: #{tpu_custom_call.1} parent=1 // pred_check_branch
      %90 = sbr.rel (0) target = $region73
    $region72: #{tpu_custom_call.1} parent=1 // pred_region
      %91 = dma.done [#allocation6], 256
    $region73: #{tpu_custom_call.1} parent=1 // pred_fallthru
      _
    // Predicated region
    $region74: #{tpu_custom_call.1} parent=1 // pred_check
      _
    $region75: #{tpu_custom_call.1} parent=1 // pred_check_branch
      %93 = sbr.rel (0) target = $region77
    $region76: #{tpu_custom_call.1} parent=1 // pred_region
      %94 = dma.done [#allocation6], 512
    $region77: #{tpu_custom_call.1} parent=1 // pred_fallthru
      _
    %v95 = vld [vmem:[#allocation2] sm:$0xff]
    %v96 = vld [vmem:[#allocation2 + $0x8] sm:$0xff]
    %v97 = vld [vmem:[#allocation5] sm:$0xff]
    %v98 = vld [vmem:[#allocation5 + $0x8] sm:$0xff]
    %v99 = vadd.f32 %v95, %v97
    %v100 = vadd.f32 %v96, %v98
    %v101 = vld [vmem:[%s2] sm:$0xff]
    %v102 = vld [vmem:[%s2 + $0x8] sm:$0xff]
    %v103 = vld [vmem:[%s2 + $0x10] sm:$0xff]
    %v104 = vld [vmem:[%s2 + $0x18] sm:$0xff]
    %v105 = vld [vmem:[%s3] sm:$0x1]
    %v107 = vlaneseq
    %v108 = vshrl.u32 %v107, 7
    %v109 = vsub.s32 0, %v108
    %v110 = vrot.slane %v105, %v109
    %vm112 = vcmask 261120
    %v114 = vsel %vm112, %v99, 0
    %v117 = vsel %vm112, %v100, 0
    %119 = vmatprep.subr.mxu0 0.0
    %120 = vmatpush1.msra.mxu0 %v101
    %121 = vmatprep.subr.mxu0 0.0
    %122 = vmatpush1.msra.mxu0 %v102
    %123 = vmatprep.subr.mxu0 0.0
    %124 = vmatpush1.msra.mxu0 %v103
    %125 = vmatprep.subr.mxu0 0.0
    %126 = vmatpush1.msra.mxu0 %v104
    %127 = vmatprep.subr.mxu0 0.0
    %128 = vmatpush1.msra.mxu0 0.0
    %129 = vmatprep.subr.mxu0 0.0
    %130 = vmatpush1.msra.mxu0 0.0
    %131 = vmatprep.subr.mxu0 0.0
    %132 = vmatpush1.msra.mxu0 0.0
    %133 = vmatprep.subr.mxu0 0.0
    %134 = vmatpush1.msra.mxu0 0.0
    %135 = vmatprep.subr.mxu0 0.0
    %136 = vmatpush1.msra.mxu0 0.0
    %137 = vmatprep.subr.mxu0 0.0
    %138 = vmatpush1.msra.mxu0 0.0
    %139 = vmatprep.subr.mxu0 0.0
    %140 = vmatpush1.msra.mxu0 0.0
    %141 = vmatprep.subr.mxu0 0.0
    %142 = vmatpush1.msra.mxu0 0.0
    %143 = vmatprep.subr.mxu0 0.0
    %144 = vmatpush1.msra.mxu0 0.0
    %145 = vmatprep.subr.mxu0 0.0
    %146 = vmatpush1.msra.mxu0 0.0
    %147 = vmatprep.subr.mxu0 0.0
    %148 = vmatpush1.msra.mxu0 0.0
    %149 = vmatprep.subr.mxu0 0.0
    %150 = vmatpush1.msra.mxu0 0.0
    %151 = vmatprep.subr.mxu0 0.0
    %152 = vmatpush1.msra.mxu0 0.0
    %153 = vmatprep.subr.mxu0 0.0
    %154 = vmatpush1.msra.mxu0 0.0
    %155 = vmatprep.subr.mxu0 0.0
    %156 = vmatpush1.msra.mxu0 0.0
    %157 = vmatprep.subr.mxu0 0.0
    %158 = vmatpush1.msra.mxu0 0.0
    %159 = vmatprep.subr.mxu0 0.0
    %160 = vmatpush1.msra.mxu0 0.0
    %161 = vmatprep.subr.mxu0 0.0
    %162 = vmatpush1.msra.mxu0 0.0
    %163 = vmatprep.subr.mxu0 0.0
    %164 = vmatpush1.msra.mxu0 0.0
    %165 = vmatprep.subr.mxu0 0.0
    %166 = vmatpush1.msra.mxu0 0.0
    %167 = vmatprep.subr.mxu0 0.0
    %168 = vmatpush1.msra.mxu0 0.0
    %169 = vmatprep.subr.mxu0 0.0
    %170 = vmatpush1.msra.mxu0 0.0
    %171 = vmatprep.subr.mxu0 0.0
    %172 = vmatpush1.msra.mxu0 0.0
    %173 = vmatprep.subr.mxu0 0.0
    %174 = vmatpush1.msra.mxu0 0.0
    %175 = vmatprep.subr.mxu0 0.0
    %176 = vmatpush1.msra.mxu0 0.0
    %177 = vmatprep.subr.mxu0 0.0
    %178 = vmatpush1.msra.mxu0 0.0
    %179 = vmatprep.subr.mxu0 0.0
    %180 = vmatpush1.msra.mxu0 0.0
    %181 = vmatprep.subr.mxu0 0.0
    %182 = vmatpush1.msra.mxu0 0.0
    %183 = vmatprep.mubr.f32.mxu0 0.0
    %184 = vmatmul.mubr.f32.gmra.mrb[0].mxu0 %v114
    %v185 = vpop.f32.mrb[0].mxu0
    %v186 = vadd.f32 %v110, %v185
    %v187 = vpop.f32.mrb[0].mxu0
    %188 = vmatprep.mubr.f32.mxu0 0.0
    %189 = vmatmul.mubr.f32.gmra.mrb[0].mxu0 %v117
    %v190 = vpop.f32.mrb[0].mxu0
    %v191 = vadd.f32 %v110, %v190
    %v192 = vpop.f32.mrb[0].mxu0
    %193 = vdwg.mxu0
    %v194 = vld [vmem:[%s4] sm:$0xff]
    %v195 = vld [vmem:[%s4 + $0x8] sm:$0xff]
    %v196 = vld [vmem:[%s4 + $0x10] sm:$0xff]
    %v197 = vld [vmem:[%s4 + $0x18] sm:$0xff]
    %v198 = vld [vmem:[%s5] sm:$0x1]
    %v200 = vlaneseq
    %v201 = vshrl.u32 %v200, 7
    %v202 = vsub.s32 0, %v201
    %v203 = vrot.slane %v198, %v202
    %v206 = vsel %vm112, %v95, 0
    %v209 = vsel %vm112, %v96, 0
    %211 = vmatprep.subr.mxu0 0.0
    %212 = vmatpush1.msra.mxu0 %v194
    %213 = vmatprep.subr.mxu0 0.0
    %214 = vmatpush1.msra.mxu0 %v195
    %215 = vmatprep.subr.mxu0 0.0
    %216 = vmatpush1.msra.mxu0 %v196
    %217 = vmatprep.subr.mxu0 0.0
    %218 = vmatpush1.msra.mxu0 %v197
    %219 = vmatprep.subr.mxu0 0.0
    %220 = vmatpush1.msra.mxu0 0.0
    %221 = vmatprep.subr.mxu0 0.0
    %222 = vmatpush1.msra.mxu0 0.0
    %223 = vmatprep.subr.mxu0 0.0
    %224 = vmatpush1.msra.mxu0 0.0
    %225 = vmatprep.subr.mxu0 0.0
    %226 = vmatpush1.msra.mxu0 0.0
    %227 = vmatprep.subr.mxu0 0.0
    %228 = vmatpush1.msra.mxu0 0.0
    %229 = vmatprep.subr.mxu0 0.0
    %230 = vmatpush1.msra.mxu0 0.0
    %231 = vmatprep.subr.mxu0 0.0
    %232 = vmatpush1.msra.mxu0 0.0
    %233 = vmatprep.subr.mxu0 0.0
    %234 = vmatpush1.msra.mxu0 0.0
    %235 = vmatprep.subr.mxu0 0.0
    %236 = vmatpush1.msra.mxu0 0.0
    %237 = vmatprep.subr.mxu0 0.0
    %238 = vmatpush1.msra.mxu0 0.0
    %239 = vmatprep.subr.mxu0 0.0
    %240 = vmatpush1.msra.mxu0 0.0
    %241 = vmatprep.subr.mxu0 0.0
    %242 = vmatpush1.msra.mxu0 0.0
    %243 = vmatprep.subr.mxu0 0.0
    %244 = vmatpush1.msra.mxu0 0.0
    %245 = vmatprep.subr.mxu0 0.0
    %246 = vmatpush1.msra.mxu0 0.0
    %247 = vmatprep.subr.mxu0 0.0
    %248 = vmatpush1.msra.mxu0 0.0
    %249 = vmatprep.subr.mxu0 0.0
    %250 = vmatpush1.msra.mxu0 0.0
    %251 = vmatprep.subr.mxu0 0.0
    %252 = vmatpush1.msra.mxu0 0.0
    %253 = vmatprep.subr.mxu0 0.0
    %254 = vmatpush1.msra.mxu0 0.0
    %255 = vmatprep.subr.mxu0 0.0
    %256 = vmatpush1.msra.mxu0 0.0
    %257 = vmatprep.subr.mxu0 0.0
    %258 = vmatpush1.msra.mxu0 0.0
    %259 = vmatprep.subr.mxu0 0.0
    %260 = vmatpush1.msra.mxu0 0.0
    %261 = vmatprep.subr.mxu0 0.0
    %262 = vmatpush1.msra.mxu0 0.0
    %263 = vmatprep.subr.mxu0 0.0
    %264 = vmatpush1.msra.mxu0 0.0
    %265 = vmatprep.subr.mxu0 0.0
    %266 = vmatpush1.msra.mxu0 0.0
    %267 = vmatprep.subr.mxu0 0.0
    %268 = vmatpush1.msra.mxu0 0.0
    %269 = vmatprep.subr.mxu0 0.0
    %270 = vmatpush1.msra.mxu0 0.0
    %271 = vmatprep.subr.mxu0 0.0
    %272 = vmatpush1.msra.mxu0 0.0
    %273 = vmatprep.subr.mxu0 0.0
    %274 = vmatpush1.msra.mxu0 0.0
    %275 = vmatprep.mubr.f32.mxu0 0.0
    %276 = vmatmul.mubr.f32.gmra.mrb[0].mxu0 %v206
    %v277 = vpop.f32.mrb[0].mxu0
    %v278 = vadd.f32 %v203, %v277
    %v279 = vpop.f32.mrb[0].mxu0
    %280 = vmatprep.mubr.f32.mxu0 0.0
    %281 = vmatmul.mubr.f32.gmra.mrb[0].mxu0 %v209
    %v282 = vpop.f32.mrb[0].mxu0
    %v283 = vadd.f32 %v203, %v282
    %v284 = vpop.f32.mrb[0].mxu0
    %285 = vdwg.mxu0
    %v286 = vlaneseq
    %v287 = vshrl.u32 %v286, 7
    %v288 = vadd.s32 %v287, 8
    %v289 = vlaneseq
    %v290 = vand.u32 %v289, 127
    %vm291 = vcmp.lt.s32.totalorder %v287, 0
    %v292 = vsub.s32 0, %v287
    %v293 = vsel %vm291, %v292, %v287
    %v294 = vshrl.u32 %v293, 1
    %v295 = vand.u32 %v293, 1
    %v296 = vsub.s32 0, %v295
    %v297 = vsel %vm291, %v296, %v295
    %vm298 = vcmp.lt.s32.totalorder %v288, 0
    %v299 = vsub.s32 0, %v288
    %v300 = vsel %vm298, %v299, %v288
    %v301 = vshrl.u32 %v300, 1
    %v302 = vand.u32 %v300, 1
    %v303 = vsub.s32 0, %v302
    %v304 = vsel %vm298, %v303, %v302
    %vm305 = vcmp.ne.s32.totalorder %v297, 0
    %vm306 = vcmp.ne.s32.totalorder %v304, 0
    %vm307 = vcmp.lt.s32.totalorder %v297, 0
    %vm308 = vcmp.lt.s32.totalorder %v304, 0
    %vm309 = vmand %vm307, %vm305
    %vm310 = vmand %vm308, %vm306
    %v311 = vadd.s32 %v297, 2
    %v312 = vadd.s32 %v304, 2
    %v313 = vsel %vm309, %v311, %v297
    %v314 = vsel %vm310, %v312, %v304
    %vm315 = vcmp.lt.s32.totalorder %v290, 0
    %v316 = vsub.s32 0, %v290
    %v317 = vsel %vm315, %v316, %v290
    %v318 = vshrl.u32 %v317, 1
    %v319 = vand.u32 %v317, 1
    %v320 = vsub.s32 0, %v319
    %v321 = vsel %vm315, %v320, %v319
    %vm322 = vcmp.ne.s32.totalorder %v321, 0
    %vm323 = vcmp.lt.s32.totalorder %v321, 0
    %vm324 = vmand %vm323, %vm322
    %v325 = vadd.s32 %v321, 2
    %v326 = vsel %vm324, %v325, %v321
    %vm327 = vcmp.eq.s32.totalorder %v313, %v326
    %vm328 = vcmp.eq.s32.totalorder %v314, %v326
    %v329 = vld [vmem:[%s6] sm:$0xff]
    %v330 = vld [vmem:[%s6 + $0x8] sm:$0xff]
    %v331 = vld [vmem:[%s6 + $0x10] sm:$0xff]
    %v332 = vld [vmem:[%s6 + $0x18] sm:$0xff]
    %335 = vrot.lane.b32.xlu0 %v186, 96
    %v336 = vpop.permute.xlu0 %335
    %337 = vrot.lane.b32.xlu0 %v191, 96
    %v338 = vpop.permute.xlu0 %337
    %vm339 = vcmask 64512
    %v340 = vsel %vm339, %v186, 0
    %v342 = vsel %vm339, %v191, 0
    %v344 = vsel %vm339, %v336, 0
    %v346 = vsel %vm339, %v338, 0
    %348 = vmatprep.subr.mxu0 0.0
    %349 = vmatpush1.xpose.msra.mxu0 %v344
    %350 = vmatprep.subr.mxu0 0.0
    %351 = vmatpush1.xpose.msra.mxu0 %v346
    %352 = vmatprep.subr.mxu0 0.0
    %353 = vmatpush1.xpose.msra.mxu0 0.0
    %354 = vmatprep.subr.mxu0 0.0
    %355 = vmatpush1.xpose.msra.mxu0 0.0
    %356 = vmatprep.subr.mxu0 0.0
    %357 = vmatpush1.xpose.msra.mxu0 0.0
    %358 = vmatprep.subr.mxu0 0.0
    %359 = vmatpush1.xpose.msra.mxu0 0.0
    %360 = vmatprep.subr.mxu0 0.0
    %361 = vmatpush1.xpose.msra.mxu0 0.0
    %362 = vmatprep.subr.mxu0 0.0
    %363 = vmatpush1.xpose.msra.mxu0 0.0
    %364 = vmatprep.subr.mxu0 0.0
    %365 = vmatpush1.xpose.msra.mxu0 0.0
    %366 = vmatprep.subr.mxu0 0.0
    %367 = vmatpush1.xpose.msra.mxu0 0.0
    %368 = vmatprep.subr.mxu0 0.0
    %369 = vmatpush1.xpose.msra.mxu0 0.0
    %370 = vmatprep.subr.mxu0 0.0
    %371 = vmatpush1.xpose.msra.mxu0 0.0
    %372 = vmatprep.subr.mxu0 0.0
    %373 = vmatpush1.xpose.msra.mxu0 0.0
    %374 = vmatprep.subr.mxu0 0.0
    %375 = vmatpush1.xpose.msra.mxu0 0.0
    %376 = vmatprep.subr.mxu0 0.0
    %377 = vmatpush1.xpose.msra.mxu0 0.0
    %378 = vmatprep.subr.mxu0 0.0
    %379 = vmatpush1.xpose.msra.mxu0 0.0
    %380 = vmatprep.subr.mxu0 0.0
    %381 = vmatpush1.xpose.msra.mxu0 0.0
    %382 = vmatprep.subr.mxu0 0.0
    %383 = vmatpush1.xpose.msra.mxu0 0.0
    %384 = vmatprep.subr.mxu0 0.0
    %385 = vmatpush1.xpose.msra.mxu0 0.0
    %386 = vmatprep.subr.mxu0 0.0
    %387 = vmatpush1.xpose.msra.mxu0 0.0
    %388 = vmatprep.subr.mxu0 0.0
    %389 = vmatpush1.xpose.msra.mxu0 0.0
    %390 = vmatprep.subr.mxu0 0.0
    %391 = vmatpush1.xpose.msra.mxu0 0.0
    %392 = vmatprep.subr.mxu0 0.0
    %393 = vmatpush1.xpose.msra.mxu0 0.0
    %394 = vmatprep.subr.mxu0 0.0
    %395 = vmatpush1.xpose.msra.mxu0 0.0
    %396 = vmatprep.subr.mxu0 0.0
    %397 = vmatpush1.xpose.msra.mxu0 0.0
    %398 = vmatprep.subr.mxu0 0.0
    %399 = vmatpush1.xpose.msra.mxu0 0.0
    %400 = vmatprep.subr.mxu0 0.0
    %401 = vmatpush1.xpose.msra.mxu0 0.0
    %402 = vmatprep.subr.mxu0 0.0
    %403 = vmatpush1.xpose.msra.mxu0 0.0
    %404 = vmatprep.subr.mxu0 0.0
    %405 = vmatpush1.xpose.msra.mxu0 0.0
    %406 = vmatprep.subr.mxu0 0.0
    %407 = vmatpush1.xpose.msra.mxu0 0.0
    %408 = vmatprep.subr.mxu0 0.0
    %409 = vmatpush1.xpose.msra.mxu0 0.0
    %410 = vmatprep.subr.mxu0 0.0
    %411 = vmatpush1.xpose.msra.mxu0 0.0
    %412 = vmatprep.mubr.f32.mxu0 0.0
    %413 = vmatmul.mubr.f32.gmra.mrb[0].mxu0 %v340
    %v414 = vpop.f32.mrb[0].mxu0
    %v415 = vadd.f32 0.0, %v414
    %v416 = vpop.f32.mrb[0].mxu0
    %417 = vmatprep.mubr.f32.mxu0 0.0
    %418 = vmatmul.mubr.f32.gmra.mrb[0].mxu0 %v342
    %v419 = vpop.f32.mrb[0].mxu0
    %v420 = vadd.f32 0.0, %v419
    %v421 = vpop.f32.mrb[0].mxu0
    %422 = vdwg.mxu0
    %v423 = vsel %vm327, %v415, -1e+30
    %v424 = vsel %vm328, %v420, -1e+30
    %vm425 = vcmask 130048
    %v426 = vsel %vm425, %v423, -inf
    %427 = vmax.xlane.f32.xlu0 %v426
    %v428 = vpop.xlane.xlu0 %427
    %v429 = vsel %vm425, %v424, -inf
    %430 = vmax.xlane.f32.xlu0 %v429
    %v431 = vpop.xlane.xlu0 %430
    %v432 = vsub.f32 %v423, %v428
    %v433 = vsub.f32 %v424, %v431
    %v434 = vmul.f32 %v432, 1.442695
    %v435 = vpow.pop %v434
    %v436 = vmul.f32 %v433, 1.442695
    %v437 = vpow.pop %v436
    %v438 = vsel %vm425, %v435, 0.0
    %439 = vadd.xlane.f32.xlu0 %v438
    %v440 = vpop.xlane.xlu0 %439
    %v441 = vsel %vm425, %v437, 0.0
    %442 = vadd.xlane.f32.xlu0 %v441
    %v443 = vpop.xlane.xlu0 %442
    %v444 = vrcp.pop %v440
    %v445 = vrcp.pop %v443
    %v446 = vmul.f32 %v435, %v444
    %v447 = vmul.f32 %v437, %v445
    %v449 = vsel %vm425, %v446, 0
    %v452 = vsel %vm425, %v447, 0
    %454 = vmatprep.subr.mxu0 0.0
    %455 = vmatpush1.msra.mxu0 %v278
    %456 = vmatprep.subr.mxu0 0.0
    %457 = vmatpush1.msra.mxu0 %v283
    %458 = vmatprep.subr.mxu0 0.0
    %459 = vmatpush1.msra.mxu0 0.0
    %460 = vmatprep.subr.mxu0 0.0
    %461 = vmatpush1.msra.mxu0 0.0
    %462 = vmatprep.subr.mxu0 0.0
    %463 = vmatpush1.msra.mxu0 0.0
    %464 = vmatprep.subr.mxu0 0.0
    %465 = vmatpush1.msra.mxu0 0.0
    %466 = vmatprep.subr.mxu0 0.0
    %467 = vmatpush1.msra.mxu0 0.0
    %468 = vmatprep.subr.mxu0 0.0
    %469 = vmatpush1.msra.mxu0 0.0
    %470 = vmatprep.subr.mxu0 0.0
    %471 = vmatpush1.msra.mxu0 0.0
    %472 = vmatprep.subr.mxu0 0.0
    %473 = vmatpush1.msra.mxu0 0.0
    %474 = vmatprep.subr.mxu0 0.0
    %475 = vmatpush1.msra.mxu0 0.0
    %476 = vmatprep.subr.mxu0 0.0
    %477 = vmatpush1.msra.mxu0 0.0
    %478 = vmatprep.subr.mxu0 0.0
    %479 = vmatpush1.msra.mxu0 0.0
    %480 = vmatprep.subr.mxu0 0.0
    %481 = vmatpush1.msra.mxu0 0.0
    %482 = vmatprep.subr.mxu0 0.0
    %483 = vmatpush1.msra.mxu0 0.0
    %484 = vmatprep.subr.mxu0 0.0
    %485 = vmatpush1.msra.mxu0 0.0
    %486 = vmatprep.subr.mxu0 0.0
    %487 = vmatpush1.msra.mxu0 0.0
    %488 = vmatprep.subr.mxu0 0.0
    %489 = vmatpush1.msra.mxu0 0.0
    %490 = vmatprep.subr.mxu0 0.0
    %491 = vmatpush1.msra.mxu0 0.0
    %492 = vmatprep.subr.mxu0 0.0
    %493 = vmatpush1.msra.mxu0 0.0
    %494 = vmatprep.subr.mxu0 0.0
    %495 = vmatpush1.msra.mxu0 0.0
    %496 = vmatprep.subr.mxu0 0.0
    %497 = vmatpush1.msra.mxu0 0.0
    %498 = vmatprep.subr.mxu0 0.0
    %499 = vmatpush1.msra.mxu0 0.0
    %500 = vmatprep.subr.mxu0 0.0
    %501 = vmatpush1.msra.mxu0 0.0
    %502 = vmatprep.subr.mxu0 0.0
    %503 = vmatpush1.msra.mxu0 0.0
    %504 = vmatprep.subr.mxu0 0.0
    %505 = vmatpush1.msra.mxu0 0.0
    %506 = vmatprep.subr.mxu0 0.0
    %507 = vmatpush1.msra.mxu0 0.0
    %508 = vmatprep.subr.mxu0 0.0
    %509 = vmatpush1.msra.mxu0 0.0
    %510 = vmatprep.subr.mxu0 0.0
    %511 = vmatpush1.msra.mxu0 0.0
    %512 = vmatprep.subr.mxu0 0.0
    %513 = vmatpush1.msra.mxu0 0.0
    %514 = vmatprep.subr.mxu0 0.0
    %515 = vmatpush1.msra.mxu0 0.0
    %516 = vmatprep.subr.mxu0 0.0
    %517 = vmatpush1.msra.mxu0 0.0
    %518 = vmatprep.mubr.f32.mxu0 0.0
    %519 = vmatmul.mubr.f32.gmra.mrb[0].mxu0 %v449
    %v520 = vpop.f32.mrb[0].mxu0
    %v521 = vadd.f32 0.0, %v520
    %v522 = vpop.f32.mrb[0].mxu0
    %523 = vmatprep.mubr.f32.mxu0 0.0
    %524 = vmatmul.mubr.f32.gmra.mrb[0].mxu0 %v452
    %v525 = vpop.f32.mrb[0].mxu0
    %v526 = vadd.f32 0.0, %v525
    %v527 = vpop.f32.mrb[0].mxu0
    %528 = vdwg.mxu0
    %529 = vrot.lane.b32.xlu0 %v186, 120
    %v530 = vpop.permute.xlu0 %529
    %531 = vrot.lane.b32.xlu0 %v191, 120
    %v532 = vpop.permute.xlu0 %531
    %533 = vrot.lane.b32.xlu0 %v186, 88
    %v534 = vpop.permute.xlu0 %533
    %535 = vrot.lane.b32.xlu0 %v191, 88
    %v536 = vpop.permute.xlu0 %535
    %v537 = vsel %vm339, %v530, 0
    %v539 = vsel %vm339, %v532, 0
    %v541 = vsel %vm339, %v534, 0
    %v543 = vsel %vm339, %v536, 0
    %545 = vmatprep.subr.mxu0 0.0
    %546 = vmatpush1.xpose.msra.mxu0 %v541
    %547 = vmatprep.subr.mxu0 0.0
    %548 = vmatpush1.xpose.msra.mxu0 %v543
    %549 = vmatprep.subr.mxu0 0.0
    %550 = vmatpush1.xpose.msra.mxu0 0.0
    %551 = vmatprep.subr.mxu0 0.0
    %552 = vmatpush1.xpose.msra.mxu0 0.0
    %553 = vmatprep.subr.mxu0 0.0
    %554 = vmatpush1.xpose.msra.mxu0 0.0
    %555 = vmatprep.subr.mxu0 0.0
    %556 = vmatpush1.xpose.msra.mxu0 0.0
    %557 = vmatprep.subr.mxu0 0.0
    %558 = vmatpush1.xpose.msra.mxu0 0.0
    %559 = vmatprep.subr.mxu0 0.0
    %560 = vmatpush1.xpose.msra.mxu0 0.0
    %561 = vmatprep.subr.mxu0 0.0
    %562 = vmatpush1.xpose.msra.mxu0 0.0
    %563 = vmatprep.subr.mxu0 0.0
    %564 = vmatpush1.xpose.msra.mxu0 0.0
    %565 = vmatprep.subr.mxu0 0.0
    %566 = vmatpush1.xpose.msra.mxu0 0.0
    %567 = vmatprep.subr.mxu0 0.0
    %568 = vmatpush1.xpose.msra.mxu0 0.0
    %569 = vmatprep.subr.mxu0 0.0
    %570 = vmatpush1.xpose.msra.mxu0 0.0
    %571 = vmatprep.subr.mxu0 0.0
    %572 = vmatpush1.xpose.msra.mxu0 0.0
    %573 = vmatprep.subr.mxu0 0.0
    %574 = vmatpush1.xpose.msra.mxu0 0.0
    %575 = vmatprep.subr.mxu0 0.0
    %576 = vmatpush1.xpose.msra.mxu0 0.0
    %577 = vmatprep.subr.mxu0 0.0
    %578 = vmatpush1.xpose.msra.mxu0 0.0
    %579 = vmatprep.subr.mxu0 0.0
    %580 = vmatpush1.xpose.msra.mxu0 0.0
    %581 = vmatprep.subr.mxu0 0.0
    %582 = vmatpush1.xpose.msra.mxu0 0.0
    %583 = vmatprep.subr.mxu0 0.0
    %584 = vmatpush1.xpose.msra.mxu0 0.0
    %585 = vmatprep.subr.mxu0 0.0
    %586 = vmatpush1.xpose.msra.mxu0 0.0
    %587 = vmatprep.subr.mxu0 0.0
    %588 = vmatpush1.xpose.msra.mxu0 0.0
    %589 = vmatprep.subr.mxu0 0.0
    %590 = vmatpush1.xpose.msra.mxu0 0.0
    %591 = vmatprep.subr.mxu0 0.0
    %592 = vmatpush1.xpose.msra.mxu0 0.0
    %593 = vmatprep.subr.mxu0 0.0
    %594 = vmatpush1.xpose.msra.mxu0 0.0
    %595 = vmatprep.subr.mxu0 0.0
    %596 = vmatpush1.xpose.msra.mxu0 0.0
    %597 = vmatprep.subr.mxu0 0.0
    %598 = vmatpush1.xpose.msra.mxu0 0.0
    %599 = vmatprep.subr.mxu0 0.0
    %600 = vmatpush1.xpose.msra.mxu0 0.0
    %601 = vmatprep.subr.mxu0 0.0
    %602 = vmatpush1.xpose.msra.mxu0 0.0
    %603 = vmatprep.subr.mxu0 0.0
    %604 = vmatpush1.xpose.msra.mxu0 0.0
    %605 = vmatprep.subr.mxu0 0.0
    %606 = vmatpush1.xpose.msra.mxu0 0.0
    %607 = vmatprep.subr.mxu0 0.0
    %608 = vmatpush1.xpose.msra.mxu0 0.0
    %609 = vmatprep.mubr.f32.mxu0 0.0
    %610 = vmatmul.mubr.f32.gmra.mrb[0].mxu0 %v537
    %v611 = vpop.f32.mrb[0].mxu0
    %v612 = vadd.f32 0.0, %v611
    %v613 = vpop.f32.mrb[0].mxu0
    %614 = vmatprep.mubr.f32.mxu0 0.0
    %615 = vmatmul.mubr.f32.gmra.mrb[0].mxu0 %v539
    %v616 = vpop.f32.mrb[0].mxu0
    %v617 = vadd.f32 0.0, %v616
    %v618 = vpop.f32.mrb[0].mxu0
    %619 = vdwg.mxu0
    %v620 = vsel %vm327, %v612, -1e+30
    %v621 = vsel %vm328, %v617, -1e+30
    %v622 = vsel %vm425, %v620, -inf
    %623 = vmax.xlane.f32.xlu0 %v622
    %v624 = vpop.xlane.xlu0 %623
    %v625 = vsel %vm425, %v621, -inf
    %626 = vmax.xlane.f32.xlu0 %v625
    %v627 = vpop.xlane.xlu0 %626
    %v628 = vsub.f32 %v620, %v624
    %v629 = vsub.f32 %v621, %v627
    %v630 = vmul.f32 %v628, 1.442695
    %v631 = vpow.pop %v630
    %v632 = vmul.f32 %v629, 1.442695
    %v633 = vpow.pop %v632
    %v634 = vsel %vm425, %v631, 0.0
    %635 = vadd.xlane.f32.xlu0 %v634
    %v636 = vpop.xlane.xlu0 %635
    %v637 = vsel %vm425, %v633, 0.0
    %638 = vadd.xlane.f32.xlu0 %v637
    %v639 = vpop.xlane.xlu0 %638
    %v640 = vrcp.pop %v636
    %v641 = vrcp.pop %v639
    %v642 = vmul.f32 %v631, %v640
    %v643 = vmul.f32 %v633, %v641
    %646 = vrot.lane.b32.xlu0 %v278, 120
    %v647 = vpop.permute.xlu0 %646
    %648 = vrot.lane.b32.xlu0 %v283, 120
    %v649 = vpop.permute.xlu0 %648
    %v653 = vsel %vm425, %v642, 0
    %v656 = vsel %vm425, %v643, 0
    %658 = vmatprep.subr.mxu0 0.0
    %659 = vmatpush1.msra.mxu0 %v647
    %660 = vmatprep.subr.mxu0 0.0
    %661 = vmatpush1.msra.mxu0 %v649
    %662 = vmatprep.subr.mxu0 0.0
    %663 = vmatpush1.msra.mxu0 0.0
    %664 = vmatprep.subr.mxu0 0.0
    %665 = vmatpush1.msra.mxu0 0.0
    %666 = vmatprep.subr.mxu0 0.0
    %667 = vmatpush1.msra.mxu0 0.0
    %668 = vmatprep.subr.mxu0 0.0
    %669 = vmatpush1.msra.mxu0 0.0
    %670 = vmatprep.subr.mxu0 0.0
    %671 = vmatpush1.msra.mxu0 0.0
    %672 = vmatprep.subr.mxu0 0.0
    %673 = vmatpush1.msra.mxu0 0.0
    %674 = vmatprep.subr.mxu0 0.0
    %675 = vmatpush1.msra.mxu0 0.0
    %676 = vmatprep.subr.mxu0 0.0
    %677 = vmatpush1.msra.mxu0 0.0
    %678 = vmatprep.subr.mxu0 0.0
    %679 = vmatpush1.msra.mxu0 0.0
    %680 = vmatprep.subr.mxu0 0.0
    %681 = vmatpush1.msra.mxu0 0.0
    %682 = vmatprep.subr.mxu0 0.0
    %683 = vmatpush1.msra.mxu0 0.0
    %684 = vmatprep.subr.mxu0 0.0
    %685 = vmatpush1.msra.mxu0 0.0
    %686 = vmatprep.subr.mxu0 0.0
    %687 = vmatpush1.msra.mxu0 0.0
    %688 = vmatprep.subr.mxu0 0.0
    %689 = vmatpush1.msra.mxu0 0.0
    %690 = vmatprep.subr.mxu0 0.0
    %691 = vmatpush1.msra.mxu0 0.0
    %692 = vmatprep.subr.mxu0 0.0
    %693 = vmatpush1.msra.mxu0 0.0
    %694 = vmatprep.subr.mxu0 0.0
    %695 = vmatpush1.msra.mxu0 0.0
    %696 = vmatprep.subr.mxu0 0.0
    %697 = vmatpush1.msra.mxu0 0.0
    %698 = vmatprep.subr.mxu0 0.0
    %699 = vmatpush1.msra.mxu0 0.0
    %700 = vmatprep.subr.mxu0 0.0
    %701 = vmatpush1.msra.mxu0 0.0
    %702 = vmatprep.subr.mxu0 0.0
    %703 = vmatpush1.msra.mxu0 0.0
    %704 = vmatprep.subr.mxu0 0.0
    %705 = vmatpush1.msra.mxu0 0.0
    %706 = vmatprep.subr.mxu0 0.0
    %707 = vmatpush1.msra.mxu0 0.0
    %708 = vmatprep.subr.mxu0 0.0
    %709 = vmatpush1.msra.mxu0 0.0
    %710 = vmatprep.subr.mxu0 0.0
    %711 = vmatpush1.msra.mxu0 0.0
    %712 = vmatprep.subr.mxu0 0.0
    %713 = vmatpush1.msra.mxu0 0.0
    %714 = vmatprep.subr.mxu0 0.0
    %715 = vmatpush1.msra.mxu0 0.0
    %716 = vmatprep.subr.mxu0 0.0
    %717 = vmatpush1.msra.mxu0 0.0
    %718 = vmatprep.subr.mxu0 0.0
    %719 = vmatpush1.msra.mxu0 0.0
    %720 = vmatprep.subr.mxu0 0.0
    %721 = vmatpush1.msra.mxu0 0.0
    %722 = vmatprep.mubr.f32.mxu0 0.0
    %723 = vmatmul.mubr.f32.gmra.mrb[0].mxu0 %v653
    %v724 = vpop.f32.mrb[0].mxu0
    %v725 = vadd.f32 0.0, %v724
    %v726 = vpop.f32.mrb[0].mxu0
    %727 = vmatprep.mubr.f32.mxu0 0.0
    %728 = vmatmul.mubr.f32.gmra.mrb[0].mxu0 %v656
    %v729 = vpop.f32.mrb[0].mxu0
    %v730 = vadd.f32 0.0, %v729
    %v731 = vpop.f32.mrb[0].mxu0
    %732 = vdwg.mxu0
    %v734 = vsel %vm339, %v725, 0
    %v737 = vsel %vm339, %v730, 0
    %739 = vmatprep.subr.mxu0 0.0
    %740 = vmatpush1.msra.mxu0 %v330
    %741 = vmatprep.subr.mxu0 0.0
    %742 = vmatpush1.msra.mxu0 0.0
    %743 = vmatprep.subr.mxu0 0.0
    %744 = vmatpush1.msra.mxu0 0.0
    %745 = vmatprep.subr.mxu0 0.0
    %746 = vmatpush1.msra.mxu0 0.0
    %747 = vmatprep.subr.mxu0 0.0
    %748 = vmatpush1.msra.mxu0 0.0
    %749 = vmatprep.subr.mxu0 0.0
    %750 = vmatpush1.msra.mxu0 0.0
    %751 = vmatprep.subr.mxu0 0.0
    %752 = vmatpush1.msra.mxu0 0.0
    %753 = vmatprep.subr.mxu0 0.0
    %754 = vmatpush1.msra.mxu0 0.0
    %755 = vmatprep.subr.mxu0 0.0
    %756 = vmatpush1.msra.mxu0 0.0
    %757 = vmatprep.subr.mxu0 0.0
    %758 = vmatpush1.msra.mxu0 0.0
    %759 = vmatprep.subr.mxu0 0.0
    %760 = vmatpush1.msra.mxu0 0.0
    %761 = vmatprep.subr.mxu0 0.0
    %762 = vmatpush1.msra.mxu0 0.0
    %763 = vmatprep.subr.mxu0 0.0
    %764 = vmatpush1.msra.mxu0 0.0
    %765 = vmatprep.subr.mxu0 0.0
    %766 = vmatpush1.msra.mxu0 0.0
    %767 = vmatprep.subr.mxu0 0.0
    %768 = vmatpush1.msra.mxu0 0.0
    %769 = vmatprep.subr.mxu0 0.0
    %770 = vmatpush1.msra.mxu0 0.0
    %771 = vmatprep.subr.mxu0 0.0
    %772 = vmatpush1.msra.mxu0 0.0
    %773 = vmatprep.subr.mxu0 0.0
    %774 = vmatpush1.msra.mxu0 0.0
    %775 = vmatprep.subr.mxu0 0.0
    %776 = vmatpush1.msra.mxu0 0.0
    %777 = vmatprep.subr.mxu0 0.0
    %778 = vmatpush1.msra.mxu0 0.0
    %779 = vmatprep.subr.mxu0 0.0
    %780 = vmatpush1.msra.mxu0 0.0
    %781 = vmatprep.subr.mxu0 0.0
    %782 = vmatpush1.msra.mxu0 0.0
    %783 = vmatprep.subr.mxu0 0.0
    %784 = vmatpush1.msra.mxu0 0.0
    %785 = vmatprep.subr.mxu0 0.0
    %786 = vmatpush1.msra.mxu0 0.0
    %787 = vmatprep.subr.mxu0 0.0
    %788 = vmatpush1.msra.mxu0 0.0
    %789 = vmatprep.subr.mxu0 0.0
    %790 = vmatpush1.msra.mxu0 0.0
    %791 = vmatprep.subr.mxu0 0.0
    %792 = vmatpush1.msra.mxu0 0.0
    %793 = vmatprep.subr.mxu0 0.0
    %794 = vmatpush1.msra.mxu0 0.0
    %795 = vmatprep.subr.mxu0 0.0
    %796 = vmatpush1.msra.mxu0 0.0
    %797 = vmatprep.subr.mxu0 0.0
    %798 = vmatpush1.msra.mxu0 0.0
    %799 = vmatprep.subr.mxu0 0.0
    %800 = vmatpush1.msra.mxu0 0.0
    %801 = vmatprep.subr.mxu0 0.0
    %802 = vmatpush1.msra.mxu0 0.0
    %803 = vmatprep.mubr.f32.mxu0 0.0
    %804 = vmatmul.mubr.f32.gmra.mrb[0].mxu0 %v734
    %v805 = vpop.f32.mrb[0].mxu0
    %v806 = vadd.f32 0.0, %v805
    %v807 = vpop.f32.mrb[0].mxu0
    %808 = vmatprep.mubr.f32.mxu0 0.0
    %809 = vmatmul.mubr.f32.gmra.mrb[0].mxu0 %v737
    %v810 = vpop.f32.mrb[0].mxu0
    %v811 = vadd.f32 0.0, %v810
    %v812 = vpop.f32.mrb[0].mxu0
    %813 = vdwg.mxu0
    %v815 = vsel %vm339, %v521, 0
    %v818 = vsel %vm339, %v526, 0
    %820 = vmatprep.subr.mxu0 0.0
    %821 = vmatpush1.msra.mxu0 %v329
    %822 = vmatprep.subr.mxu0 0.0
    %823 = vmatpush1.msra.mxu0 0.0
    %824 = vmatprep.subr.mxu0 0.0
    %825 = vmatpush1.msra.mxu0 0.0
    %826 = vmatprep.subr.mxu0 0.0
    %827 = vmatpush1.msra.mxu0 0.0
    %828 = vmatprep.subr.mxu0 0.0
    %829 = vmatpush1.msra.mxu0 0.0
    %830 = vmatprep.subr.mxu0 0.0
    %831 = vmatpush1.msra.mxu0 0.0
    %832 = vmatprep.subr.mxu0 0.0
    %833 = vmatpush1.msra.mxu0 0.0
    %834 = vmatprep.subr.mxu0 0.0
    %835 = vmatpush1.msra.mxu0 0.0
    %836 = vmatprep.subr.mxu0 0.0
    %837 = vmatpush1.msra.mxu0 0.0
    %838 = vmatprep.subr.mxu0 0.0
    %839 = vmatpush1.msra.mxu0 0.0
    %840 = vmatprep.subr.mxu0 0.0
    %841 = vmatpush1.msra.mxu0 0.0
    %842 = vmatprep.subr.mxu0 0.0
    %843 = vmatpush1.msra.mxu0 0.0
    %844 = vmatprep.subr.mxu0 0.0
    %845 = vmatpush1.msra.mxu0 0.0
    %846 = vmatprep.subr.mxu0 0.0
    %847 = vmatpush1.msra.mxu0 0.0
    %848 = vmatprep.subr.mxu0 0.0
    %849 = vmatpush1.msra.mxu0 0.0
    %850 = vmatprep.subr.mxu0 0.0
    %851 = vmatpush1.msra.mxu0 0.0
    %852 = vmatprep.subr.mxu0 0.0
    %853 = vmatpush1.msra.mxu0 0.0
    %854 = vmatprep.subr.mxu0 0.0
    %855 = vmatpush1.msra.mxu0 0.0
    %856 = vmatprep.subr.mxu0 0.0
    %857 = vmatpush1.msra.mxu0 0.0
    %858 = vmatprep.subr.mxu0 0.0
    %859 = vmatpush1.msra.mxu0 0.0
    %860 = vmatprep.subr.mxu0 0.0
    %861 = vmatpush1.msra.mxu0 0.0
    %862 = vmatprep.subr.mxu0 0.0
    %863 = vmatpush1.msra.mxu0 0.0
    %864 = vmatprep.subr.mxu0 0.0
    %865 = vmatpush1.msra.mxu0 0.0
    %866 = vmatprep.subr.mxu0 0.0
    %867 = vmatpush1.msra.mxu0 0.0
    %868 = vmatprep.subr.mxu0 0.0
    %869 = vmatpush1.msra.mxu0 0.0
    %870 = vmatprep.subr.mxu0 0.0
    %871 = vmatpush1.msra.mxu0 0.0
    %872 = vmatprep.subr.mxu0 0.0
    %873 = vmatpush1.msra.mxu0 0.0
    %874 = vmatprep.subr.mxu0 0.0
    %875 = vmatpush1.msra.mxu0 0.0
    %876 = vmatprep.subr.mxu0 0.0
    %877 = vmatpush1.msra.mxu0 0.0
    %878 = vmatprep.subr.mxu0 0.0
    %879 = vmatpush1.msra.mxu0 0.0
    %880 = vmatprep.subr.mxu0 0.0
    %881 = vmatpush1.msra.mxu0 0.0
    %882 = vmatprep.subr.mxu0 0.0
    %883 = vmatpush1.msra.mxu0 0.0
    %884 = vmatprep.mubr.f32.mxu0 0.0
    %885 = vmatmul.mubr.f32.gmra.mrb[0].mxu0 %v815
    %v886 = vpop.f32.mrb[0].mxu0
    %v887 = vadd.f32 %v806, %v886
    %v888 = vpop.f32.mrb[0].mxu0
    %889 = vmatprep.mubr.f32.mxu0 0.0
    %890 = vmatmul.mubr.f32.gmra.mrb[0].mxu0 %v818
    %v891 = vpop.f32.mrb[0].mxu0
    %v892 = vadd.f32 %v811, %v891
    %v893 = vpop.f32.mrb[0].mxu0
    %894 = vdwg.mxu0
    %895 = vrot.lane.b32.xlu0 %v186, 112
    %v896 = vpop.permute.xlu0 %895
    %897 = vrot.lane.b32.xlu0 %v191, 112
    %v898 = vpop.permute.xlu0 %897
    %899 = vrot.lane.b32.xlu0 %v186, 80
    %v900 = vpop.permute.xlu0 %899
    %901 = vrot.lane.b32.xlu0 %v191, 80
    %v902 = vpop.permute.xlu0 %901
    %v903 = vsel %vm339, %v896, 0
    %v905 = vsel %vm339, %v898, 0
    %v907 = vsel %vm339, %v900, 0
    %v909 = vsel %vm339, %v902, 0
    %911 = vmatprep.subr.mxu0 0.0
    %912 = vmatpush1.xpose.msra.mxu0 %v907
    %913 = vmatprep.subr.mxu0 0.0
    %914 = vmatpush1.xpose.msra.mxu0 %v909
    %915 = vmatprep.subr.mxu0 0.0
    %916 = vmatpush1.xpose.msra.mxu0 0.0
    %917 = vmatprep.subr.mxu0 0.0
    %918 = vmatpush1.xpose.msra.mxu0 0.0
    %919 = vmatprep.subr.mxu0 0.0
    %920 = vmatpush1.xpose.msra.mxu0 0.0
    %921 = vmatprep.subr.mxu0 0.0
    %922 = vmatpush1.xpose.msra.mxu0 0.0
    %923 = vmatprep.subr.mxu0 0.0
    %924 = vmatpush1.xpose.msra.mxu0 0.0
    %925 = vmatprep.subr.mxu0 0.0
    %926 = vmatpush1.xpose.msra.mxu0 0.0
    %927 = vmatprep.subr.mxu0 0.0
    %928 = vmatpush1.xpose.msra.mxu0 0.0
    %929 = vmatprep.subr.mxu0 0.0
    %930 = vmatpush1.xpose.msra.mxu0 0.0
    %931 = vmatprep.subr.mxu0 0.0
    %932 = vmatpush1.xpose.msra.mxu0 0.0
    %933 = vmatprep.subr.mxu0 0.0
    %934 = vmatpush1.xpose.msra.mxu0 0.0
    %935 = vmatprep.subr.mxu0 0.0
    %936 = vmatpush1.xpose.msra.mxu0 0.0
    %937 = vmatprep.subr.mxu0 0.0
    %938 = vmatpush1.xpose.msra.mxu0 0.0
    %939 = vmatprep.subr.mxu0 0.0
    %940 = vmatpush1.xpose.msra.mxu0 0.0
    %941 = vmatprep.subr.mxu0 0.0
    %942 = vmatpush1.xpose.msra.mxu0 0.0
    %943 = vmatprep.subr.mxu0 0.0
    %944 = vmatpush1.xpose.msra.mxu0 0.0
    %945 = vmatprep.subr.mxu0 0.0
    %946 = vmatpush1.xpose.msra.mxu0 0.0
    %947 = vmatprep.subr.mxu0 0.0
    %948 = vmatpush1.xpose.msra.mxu0 0.0
    %949 = vmatprep.subr.mxu0 0.0
    %950 = vmatpush1.xpose.msra.mxu0 0.0
    %951 = vmatprep.subr.mxu0 0.0
    %952 = vmatpush1.xpose.msra.mxu0 0.0
    %953 = vmatprep.subr.mxu0 0.0
    %954 = vmatpush1.xpose.msra.mxu0 0.0
    %955 = vmatprep.subr.mxu0 0.0
    %956 = vmatpush1.xpose.msra.mxu0 0.0
    %957 = vmatprep.subr.mxu0 0.0
    %958 = vmatpush1.xpose.msra.mxu0 0.0
    %959 = vmatprep.subr.mxu0 0.0
    %960 = vmatpush1.xpose.msra.mxu0 0.0
    %961 = vmatprep.subr.mxu0 0.0
    %962 = vmatpush1.xpose.msra.mxu0 0.0
    %963 = vmatprep.subr.mxu0 0.0
    %964 = vmatpush1.xpose.msra.mxu0 0.0
    %965 = vmatprep.subr.mxu0 0.0
    %966 = vmatpush1.xpose.msra.mxu0 0.0
    %967 = vmatprep.subr.mxu0 0.0
    %968 = vmatpush1.xpose.msra.mxu0 0.0
    %969 = vmatprep.subr.mxu0 0.0
    %970 = vmatpush1.xpose.msra.mxu0 0.0
    %971 = vmatprep.subr.mxu0 0.0
    %972 = vmatpush1.xpose.msra.mxu0 0.0
    %973 = vmatprep.subr.mxu0 0.0
    %974 = vmatpush1.xpose.msra.mxu0 0.0
    %975 = vmatprep.mubr.f32.mxu0 0.0
    %976 = vmatmul.mubr.f32.gmra.mrb[0].mxu0 %v903
    %v977 = vpop.f32.mrb[0].mxu0
    %v978 = vadd.f32 0.0, %v977
    %v979 = vpop.f32.mrb[0].mxu0
    %980 = vmatprep.mubr.f32.mxu0 0.0
    %981 = vmatmul.mubr.f32.gmra.mrb[0].mxu0 %v905
    %v982 = vpop.f32.mrb[0].mxu0
    %v983 = vadd.f32 0.0, %v982
    %v984 = vpop.f32.mrb[0].mxu0
    %985 = vdwg.mxu0
    %v986 = vsel %vm327, %v978, -1e+30
    %v987 = vsel %vm328, %v983, -1e+30
    %v988 = vsel %vm425, %v986, -inf
    %989 = vmax.xlane.f32.xlu0 %v988
    %v990 = vpop.xlane.xlu0 %989
    %v991 = vsel %vm425, %v987, -inf
    %992 = vmax.xlane.f32.xlu0 %v991
    %v993 = vpop.xlane.xlu0 %992
    %v994 = vsub.f32 %v986, %v990
    %v995 = vsub.f32 %v987, %v993
    %v996 = vmul.f32 %v994, 1.442695
    %v997 = vpow.pop %v996
    %v998 = vmul.f32 %v995, 1.442695
    %v999 = vpow.pop %v998
    %v1000 = vsel %vm425, %v997, 0.0
    %1001 = vadd.xlane.f32.xlu0 %v1000
    %v1002 = vpop.xlane.xlu0 %1001
    %v1003 = vsel %vm425, %v999, 0.0
    %1004 = vadd.xlane.f32.xlu0 %v1003
    %v1005 = vpop.xlane.xlu0 %1004
    %v1006 = vrcp.pop %v1002
    %v1007 = vrcp.pop %v1005
    %v1008 = vmul.f32 %v997, %v1006
    %v1009 = vmul.f32 %v999, %v1007
    %1010 = vrot.lane.b32.xlu0 %v278, 112
    %v1011 = vpop.permute.xlu0 %1010
    %1012 = vrot.lane.b32.xlu0 %v283, 112
    %v1013 = vpop.permute.xlu0 %1012
    %v1017 = vsel %vm425, %v1008, 0
    %v1020 = vsel %vm425, %v1009, 0
    %1022 = vmatprep.subr.mxu0 0.0
    %1023 = vmatpush1.msra.mxu0 %v1011
    %1024 = vmatprep.subr.mxu0 0.0
    %1025 = vmatpush1.msra.mxu0 %v1013
    %1026 = vmatprep.subr.mxu0 0.0
    %1027 = vmatpush1.msra.mxu0 0.0
    %1028 = vmatprep.subr.mxu0 0.0
    %1029 = vmatpush1.msra.mxu0 0.0
    %1030 = vmatprep.subr.mxu0 0.0
    %1031 = vmatpush1.msra.mxu0 0.0
    %1032 = vmatprep.subr.mxu0 0.0
    %1033 = vmatpush1.msra.mxu0 0.0
    %1034 = vmatprep.subr.mxu0 0.0
    %1035 = vmatpush1.msra.mxu0 0.0
    %1036 = vmatprep.subr.mxu0 0.0
    %1037 = vmatpush1.msra.mxu0 0.0
    %1038 = vmatprep.subr.mxu0 0.0
    %1039 = vmatpush1.msra.mxu0 0.0
    %1040 = vmatprep.subr.mxu0 0.0
    %1041 = vmatpush1.msra.mxu0 0.0
    %1042 = vmatprep.subr.mxu0 0.0
    %1043 = vmatpush1.msra.mxu0 0.0
    %1044 = vmatprep.subr.mxu0 0.0
    %1045 = vmatpush1.msra.mxu0 0.0
    %1046 = vmatprep.subr.mxu0 0.0
    %1047 = vmatpush1.msra.mxu0 0.0
    %1048 = vmatprep.subr.mxu0 0.0
    %1049 = vmatpush1.msra.mxu0 0.0
    %1050 = vmatprep.subr.mxu0 0.0
    %1051 = vmatpush1.msra.mxu0 0.0
    %1052 = vmatprep.subr.mxu0 0.0
    %1053 = vmatpush1.msra.mxu0 0.0
    %1054 = vmatprep.subr.mxu0 0.0
    %1055 = vmatpush1.msra.mxu0 0.0
    %1056 = vmatprep.subr.mxu0 0.0
    %1057 = vmatpush1.msra.mxu0 0.0
    %1058 = vmatprep.subr.mxu0 0.0
    %1059 = vmatpush1.msra.mxu0 0.0
    %1060 = vmatprep.subr.mxu0 0.0
    %1061 = vmatpush1.msra.mxu0 0.0
    %1062 = vmatprep.subr.mxu0 0.0
    %1063 = vmatpush1.msra.mxu0 0.0
    %1064 = vmatprep.subr.mxu0 0.0
    %1065 = vmatpush1.msra.mxu0 0.0
    %1066 = vmatprep.subr.mxu0 0.0
    %1067 = vmatpush1.msra.mxu0 0.0
    %1068 = vmatprep.subr.mxu0 0.0
    %1069 = vmatpush1.msra.mxu0 0.0
    %1070 = vmatprep.subr.mxu0 0.0
    %1071 = vmatpush1.msra.mxu0 0.0
    %1072 = vmatprep.subr.mxu0 0.0
    %1073 = vmatpush1.msra.mxu0 0.0
    %1074 = vmatprep.subr.mxu0 0.0
    %1075 = vmatpush1.msra.mxu0 0.0
    %1076 = vmatprep.subr.mxu0 0.0
    %1077 = vmatpush1.msra.mxu0 0.0
    %1078 = vmatprep.subr.mxu0 0.0
    %1079 = vmatpush1.msra.mxu0 0.0
    %1080 = vmatprep.subr.mxu0 0.0
    %1081 = vmatpush1.msra.mxu0 0.0
    %1082 = vmatprep.subr.mxu0 0.0
    %1083 = vmatpush1.msra.mxu0 0.0
    %1084 = vmatprep.subr.mxu0 0.0
    %1085 = vmatpush1.msra.mxu0 0.0
    %1086 = vmatprep.mubr.f32.mxu0 0.0
    %1087 = vmatmul.mubr.f32.gmra.mrb[0].mxu0 %v1017
    %v1088 = vpop.f32.mrb[0].mxu0
    %v1089 = vadd.f32 0.0, %v1088
    %v1090 = vpop.f32.mrb[0].mxu0
    %1091 = vmatprep.mubr.f32.mxu0 0.0
    %1092 = vmatmul.mubr.f32.gmra.mrb[0].mxu0 %v1020
    %v1093 = vpop.f32.mrb[0].mxu0
    %v1094 = vadd.f32 0.0, %v1093
    %v1095 = vpop.f32.mrb[0].mxu0
    %1096 = vdwg.mxu0
    %v1098 = vsel %vm339, %v1089, 0
    %v1101 = vsel %vm339, %v1094, 0
    %1103 = vmatprep.subr.mxu0 0.0
    %1104 = vmatpush1.msra.mxu0 %v331
    %1105 = vmatprep.subr.mxu0 0.0
    %1106 = vmatpush1.msra.mxu0 0.0
    %1107 = vmatprep.subr.mxu0 0.0
    %1108 = vmatpush1.msra.mxu0 0.0
    %1109 = vmatprep.subr.mxu0 0.0
    %1110 = vmatpush1.msra.mxu0 0.0
    %1111 = vmatprep.subr.mxu0 0.0
    %1112 = vmatpush1.msra.mxu0 0.0
    %1113 = vmatprep.subr.mxu0 0.0
    %1114 = vmatpush1.msra.mxu0 0.0
    %1115 = vmatprep.subr.mxu0 0.0
    %1116 = vmatpush1.msra.mxu0 0.0
    %1117 = vmatprep.subr.mxu0 0.0
    %1118 = vmatpush1.msra.mxu0 0.0
    %1119 = vmatprep.subr.mxu0 0.0
    %1120 = vmatpush1.msra.mxu0 0.0
    %1121 = vmatprep.subr.mxu0 0.0
    %1122 = vmatpush1.msra.mxu0 0.0
    %1123 = vmatprep.subr.mxu0 0.0
    %1124 = vmatpush1.msra.mxu0 0.0
    %1125 = vmatprep.subr.mxu0 0.0
    %1126 = vmatpush1.msra.mxu0 0.0
    %1127 = vmatprep.subr.mxu0 0.0
    %1128 = vmatpush1.msra.mxu0 0.0
    %1129 = vmatprep.subr.mxu0 0.0
    %1130 = vmatpush1.msra.mxu0 0.0
    %1131 = vmatprep.subr.mxu0 0.0
    %1132 = vmatpush1.msra.mxu0 0.0
    %1133 = vmatprep.subr.mxu0 0.0
    %1134 = vmatpush1.msra.mxu0 0.0
    %1135 = vmatprep.subr.mxu0 0.0
    %1136 = vmatpush1.msra.mxu0 0.0
    %1137 = vmatprep.subr.mxu0 0.0
    %1138 = vmatpush1.msra.mxu0 0.0
    %1139 = vmatprep.subr.mxu0 0.0
    %1140 = vmatpush1.msra.mxu0 0.0
    %1141 = vmatprep.subr.mxu0 0.0
    %1142 = vmatpush1.msra.mxu0 0.0
    %1143 = vmatprep.subr.mxu0 0.0
    %1144 = vmatpush1.msra.mxu0 0.0
    %1145 = vmatprep.subr.mxu0 0.0
    %1146 = vmatpush1.msra.mxu0 0.0
    %1147 = vmatprep.subr.mxu0 0.0
    %1148 = vmatpush1.msra.mxu0 0.0
    %1149 = vmatprep.subr.mxu0 0.0
    %1150 = vmatpush1.msra.mxu0 0.0
    %1151 = vmatprep.subr.mxu0 0.0
    %1152 = vmatpush1.msra.mxu0 0.0
    %1153 = vmatprep.subr.mxu0 0.0
    %1154 = vmatpush1.msra.mxu0 0.0
    %1155 = vmatprep.subr.mxu0 0.0
    %1156 = vmatpush1.msra.mxu0 0.0
    %1157 = vmatprep.subr.mxu0 0.0
    %1158 = vmatpush1.msra.mxu0 0.0
    %1159 = vmatprep.subr.mxu0 0.0
    %1160 = vmatpush1.msra.mxu0 0.0
    %1161 = vmatprep.subr.mxu0 0.0
    %1162 = vmatpush1.msra.mxu0 0.0
    %1163 = vmatprep.subr.mxu0 0.0
    %1164 = vmatpush1.msra.mxu0 0.0
    %1165 = vmatprep.subr.mxu0 0.0
    %1166 = vmatpush1.msra.mxu0 0.0
    %1167 = vmatprep.mubr.f32.mxu0 0.0
    %1168 = vmatmul.mubr.f32.gmra.mrb[0].mxu0 %v1098
    %v1169 = vpop.f32.mrb[0].mxu0
    %v1170 = vadd.f32 0.0, %v1169
    %v1171 = vpop.f32.mrb[0].mxu0
    %1172 = vmatprep.mubr.f32.mxu0 0.0
    %1173 = vmatmul.mubr.f32.gmra.mrb[0].mxu0 %v1101
    %v1174 = vpop.f32.mrb[0].mxu0
    %v1175 = vadd.f32 0.0, %v1174
    %v1176 = vpop.f32.mrb[0].mxu0
    %1177 = vdwg.mxu0
    %v1178 = vadd.f32 %v887, %v1170
    %v1179 = vadd.f32 %v892, %v1175
    %1180 = vrot.lane.b32.xlu0 %v186, 104
    %v1181 = vpop.permute.xlu0 %1180
    %1182 = vrot.lane.b32.xlu0 %v191, 104
    %v1183 = vpop.permute.xlu0 %1182
    %1184 = vrot.lane.b32.xlu0 %v186, 72
    %v1185 = vpop.permute.xlu0 %1184
    %1186 = vrot.lane.b32.xlu0 %v191, 72
    %v1187 = vpop.permute.xlu0 %1186
    %v1188 = vsel %vm339, %v1181, 0
    %v1190 = vsel %vm339, %v1183, 0
    %v1192 = vsel %vm339, %v1185, 0
    %v1194 = vsel %vm339, %v1187, 0
    %1196 = vmatprep.subr.mxu0 0.0
    %1197 = vmatpush1.xpose.msra.mxu0 %v1192
    %1198 = vmatprep.subr.mxu0 0.0
    %1199 = vmatpush1.xpose.msra.mxu0 %v1194
    %1200 = vmatprep.subr.mxu0 0.0
    %1201 = vmatpush1.xpose.msra.mxu0 0.0
    %1202 = vmatprep.subr.mxu0 0.0
    %1203 = vmatpush1.xpose.msra.mxu0 0.0
    %1204 = vmatprep.subr.mxu0 0.0
    %1205 = vmatpush1.xpose.msra.mxu0 0.0
    %1206 = vmatprep.subr.mxu0 0.0
    %1207 = vmatpush1.xpose.msra.mxu0 0.0
    %1208 = vmatprep.subr.mxu0 0.0
    %1209 = vmatpush1.xpose.msra.mxu0 0.0
    %1210 = vmatprep.subr.mxu0 0.0
    %1211 = vmatpush1.xpose.msra.mxu0 0.0
    %1212 = vmatprep.subr.mxu0 0.0
    %1213 = vmatpush1.xpose.msra.mxu0 0.0
    %1214 = vmatprep.subr.mxu0 0.0
    %1215 = vmatpush1.xpose.msra.mxu0 0.0
    %1216 = vmatprep.subr.mxu0 0.0
    %1217 = vmatpush1.xpose.msra.mxu0 0.0
    %1218 = vmatprep.subr.mxu0 0.0
    %1219 = vmatpush1.xpose.msra.mxu0 0.0
    %1220 = vmatprep.subr.mxu0 0.0
    %1221 = vmatpush1.xpose.msra.mxu0 0.0
    %1222 = vmatprep.subr.mxu0 0.0
    %1223 = vmatpush1.xpose.msra.mxu0 0.0
    %1224 = vmatprep.subr.mxu0 0.0
    %1225 = vmatpush1.xpose.msra.mxu0 0.0
    %1226 = vmatprep.subr.mxu0 0.0
    %1227 = vmatpush1.xpose.msra.mxu0 0.0
    %1228 = vmatprep.subr.mxu0 0.0
    %1229 = vmatpush1.xpose.msra.mxu0 0.0
    %1230 = vmatprep.subr.mxu0 0.0
    %1231 = vmatpush1.xpose.msra.mxu0 0.0
    %1232 = vmatprep.subr.mxu0 0.0
    %1233 = vmatpush1.xpose.msra.mxu0 0.0
    %1234 = vmatprep.subr.mxu0 0.0
    %1235 = vmatpush1.xpose.msra.mxu0 0.0
    %1236 = vmatprep.subr.mxu0 0.0
    %1237 = vmatpush1.xpose.msra.mxu0 0.0
    %1238 = vmatprep.subr.mxu0 0.0
    %1239 = vmatpush1.xpose.msra.mxu0 0.0
    %1240 = vmatprep.subr.mxu0 0.0
    %1241 = vmatpush1.xpose.msra.mxu0 0.0
    %1242 = vmatprep.subr.mxu0 0.0
    %1243 = vmatpush1.xpose.msra.mxu0 0.0
    %1244 = vmatprep.subr.mxu0 0.0
    %1245 = vmatpush1.xpose.msra.mxu0 0.0
    %1246 = vmatprep.subr.mxu0 0.0
    %1247 = vmatpush1.xpose.msra.mxu0 0.0
    %1248 = vmatprep.subr.mxu0 0.0
    %1249 = vmatpush1.xpose.msra.mxu0 0.0
    %1250 = vmatprep.subr.mxu0 0.0
    %1251 = vmatpush1.xpose.msra.mxu0 0.0
    %1252 = vmatprep.subr.mxu0 0.0
    %1253 = vmatpush1.xpose.msra.mxu0 0.0
    %1254 = vmatprep.subr.mxu0 0.0
    %1255 = vmatpush1.xpose.msra.mxu0 0.0
    %1256 = vmatprep.subr.mxu0 0.0
    %1257 = vmatpush1.xpose.msra.mxu0 0.0
    %1258 = vmatprep.subr.mxu0 0.0
    %1259 = vmatpush1.xpose.msra.mxu0 0.0
    %1260 = vmatprep.mubr.f32.mxu0 0.0
    %1261 = vmatmul.mubr.f32.gmra.mrb[0].mxu0 %v1188
    %v1262 = vpop.f32.mrb[0].mxu0
    %v1263 = vadd.f32 0.0, %v1262
    %v1264 = vpop.f32.mrb[0].mxu0
    %1265 = vmatprep.mubr.f32.mxu0 0.0
    %1266 = vmatmul.mubr.f32.gmra.mrb[0].mxu0 %v1190
    %v1267 = vpop.f32.mrb[0].mxu0
    %v1268 = vadd.f32 0.0, %v1267
    %v1269 = vpop.f32.mrb[0].mxu0
    %1270 = vdwg.mxu0
    %v1271 = vsel %vm327, %v1263, -1e+30
    %v1272 = vsel %vm328, %v1268, -1e+30
    %v1273 = vsel %vm425, %v1271, -inf
    %1274 = vmax.xlane.f32.xlu0 %v1273
    %v1275 = vpop.xlane.xlu0 %1274
    %v1276 = vsel %vm425, %v1272, -inf
    %1277 = vmax.xlane.f32.xlu0 %v1276
    %v1278 = vpop.xlane.xlu0 %1277
    %v1279 = vsub.f32 %v1271, %v1275
    %v1280 = vsub.f32 %v1272, %v1278
    %v1281 = vmul.f32 %v1279, 1.442695
    %v1282 = vpow.pop %v1281
    %v1283 = vmul.f32 %v1280, 1.442695
    %v1284 = vpow.pop %v1283
    %v1285 = vsel %vm425, %v1282, 0.0
    %1286 = vadd.xlane.f32.xlu0 %v1285
    %v1287 = vpop.xlane.xlu0 %1286
    %v1288 = vsel %vm425, %v1284, 0.0
    %1289 = vadd.xlane.f32.xlu0 %v1288
    %v1290 = vpop.xlane.xlu0 %1289
    %v1291 = vrcp.pop %v1287
    %v1292 = vrcp.pop %v1290
    %v1293 = vmul.f32 %v1282, %v1291
    %v1294 = vmul.f32 %v1284, %v1292
    %1295 = vrot.lane.b32.xlu0 %v278, 104
    %v1296 = vpop.permute.xlu0 %1295
    %1297 = vrot.lane.b32.xlu0 %v283, 104
    %v1298 = vpop.permute.xlu0 %1297
    %v1302 = vsel %vm425, %v1293, 0
    %v1305 = vsel %vm425, %v1294, 0
    %1307 = vmatprep.subr.mxu0 0.0
    %1308 = vmatpush1.msra.mxu0 %v1296
    %1309 = vmatprep.subr.mxu0 0.0
    %1310 = vmatpush1.msra.mxu0 %v1298
    %1311 = vmatprep.subr.mxu0 0.0
    %1312 = vmatpush1.msra.mxu0 0.0
    %1313 = vmatprep.subr.mxu0 0.0
    %1314 = vmatpush1.msra.mxu0 0.0
    %1315 = vmatprep.subr.mxu0 0.0
    %1316 = vmatpush1.msra.mxu0 0.0
    %1317 = vmatprep.subr.mxu0 0.0
    %1318 = vmatpush1.msra.mxu0 0.0
    %1319 = vmatprep.subr.mxu0 0.0
    %1320 = vmatpush1.msra.mxu0 0.0
    %1321 = vmatprep.subr.mxu0 0.0
    %1322 = vmatpush1.msra.mxu0 0.0
    %1323 = vmatprep.subr.mxu0 0.0
    %1324 = vmatpush1.msra.mxu0 0.0
    %1325 = vmatprep.subr.mxu0 0.0
    %1326 = vmatpush1.msra.mxu0 0.0
    %1327 = vmatprep.subr.mxu0 0.0
    %1328 = vmatpush1.msra.mxu0 0.0
    %1329 = vmatprep.subr.mxu0 0.0
    %1330 = vmatpush1.msra.mxu0 0.0
    %1331 = vmatprep.subr.mxu0 0.0
    %1332 = vmatpush1.msra.mxu0 0.0
    %1333 = vmatprep.subr.mxu0 0.0
    %1334 = vmatpush1.msra.mxu0 0.0
    %1335 = vmatprep.subr.mxu0 0.0
    %1336 = vmatpush1.msra.mxu0 0.0
    %1337 = vmatprep.subr.mxu0 0.0
    %1338 = vmatpush1.msra.mxu0 0.0
    %1339 = vmatprep.subr.mxu0 0.0
    %1340 = vmatpush1.msra.mxu0 0.0
    %1341 = vmatprep.subr.mxu0 0.0
    %1342 = vmatpush1.msra.mxu0 0.0
    %1343 = vmatprep.subr.mxu0 0.0
    %1344 = vmatpush1.msra.mxu0 0.0
    %1345 = vmatprep.subr.mxu0 0.0
    %1346 = vmatpush1.msra.mxu0 0.0
    %1347 = vmatprep.subr.mxu0 0.0
    %1348 = vmatpush1.msra.mxu0 0.0
    %1349 = vmatprep.subr.mxu0 0.0
    %1350 = vmatpush1.msra.mxu0 0.0
    %1351 = vmatprep.subr.mxu0 0.0
    %1352 = vmatpush1.msra.mxu0 0.0
    %1353 = vmatprep.subr.mxu0 0.0
    %1354 = vmatpush1.msra.mxu0 0.0
    %1355 = vmatprep.subr.mxu0 0.0
    %1356 = vmatpush1.msra.mxu0 0.0
    %1357 = vmatprep.subr.mxu0 0.0
    %1358 = vmatpush1.msra.mxu0 0.0
    %1359 = vmatprep.subr.mxu0 0.0
    %1360 = vmatpush1.msra.mxu0 0.0
    %1361 = vmatprep.subr.mxu0 0.0
    %1362 = vmatpush1.msra.mxu0 0.0
    %1363 = vmatprep.subr.mxu0 0.0
    %1364 = vmatpush1.msra.mxu0 0.0
    %1365 = vmatprep.subr.mxu0 0.0
    %1366 = vmatpush1.msra.mxu0 0.0
    %1367 = vmatprep.subr.mxu0 0.0
    %1368 = vmatpush1.msra.mxu0 0.0
    %1369 = vmatprep.subr.mxu0 0.0
    %1370 = vmatpush1.msra.mxu0 0.0
    %1371 = vmatprep.mubr.f32.mxu0 0.0
    %1372 = vmatmul.mubr.f32.gmra.mrb[0].mxu0 %v1302
    %v1373 = vpop.f32.mrb[0].mxu0
    %v1374 = vadd.f32 0.0, %v1373
    %v1375 = vpop.f32.mrb[0].mxu0
    %1376 = vmatprep.mubr.f32.mxu0 0.0
    %1377 = vmatmul.mubr.f32.gmra.mrb[0].mxu0 %v1305
    %v1378 = vpop.f32.mrb[0].mxu0
    %v1379 = vadd.f32 0.0, %v1378
    %v1380 = vpop.f32.mrb[0].mxu0
    %1381 = vdwg.mxu0
    %v1383 = vsel %vm339, %v1374, 0
    %v1386 = vsel %vm339, %v1379, 0
    %1388 = vmatprep.subr.mxu0 0.0
    %1389 = vmatpush1.msra.mxu0 %v332
    %1390 = vmatprep.subr.mxu0 0.0
    %1391 = vmatpush1.msra.mxu0 0.0
    %1392 = vmatprep.subr.mxu0 0.0
    %1393 = vmatpush1.msra.mxu0 0.0
    %1394 = vmatprep.subr.mxu0 0.0
    %1395 = vmatpush1.msra.mxu0 0.0
    %1396 = vmatprep.subr.mxu0 0.0
    %1397 = vmatpush1.msra.mxu0 0.0
    %1398 = vmatprep.subr.mxu0 0.0
    %1399 = vmatpush1.msra.mxu0 0.0
    %1400 = vmatprep.subr.mxu0 0.0
    %1401 = vmatpush1.msra.mxu0 0.0
    %1402 = vmatprep.subr.mxu0 0.0
    %1403 = vmatpush1.msra.mxu0 0.0
    %1404 = vmatprep.subr.mxu0 0.0
    %1405 = vmatpush1.msra.mxu0 0.0
    %1406 = vmatprep.subr.mxu0 0.0
    %1407 = vmatpush1.msra.mxu0 0.0
    %1408 = vmatprep.subr.mxu0 0.0
    %1409 = vmatpush1.msra.mxu0 0.0
    %1410 = vmatprep.subr.mxu0 0.0
    %1411 = vmatpush1.msra.mxu0 0.0
    %1412 = vmatprep.subr.mxu0 0.0
    %1413 = vmatpush1.msra.mxu0 0.0
    %1414 = vmatprep.subr.mxu0 0.0
    %1415 = vmatpush1.msra.mxu0 0.0
    %1416 = vmatprep.subr.mxu0 0.0
    %1417 = vmatpush1.msra.mxu0 0.0
    %1418 = vmatprep.subr.mxu0 0.0
    %1419 = vmatpush1.msra.mxu0 0.0
    %1420 = vmatprep.subr.mxu0 0.0
    %1421 = vmatpush1.msra.mxu0 0.0
    %1422 = vmatprep.subr.mxu0 0.0
    %1423 = vmatpush1.msra.mxu0 0.0
    %1424 = vmatprep.subr.mxu0 0.0
    %1425 = vmatpush1.msra.mxu0 0.0
    %1426 = vmatprep.subr.mxu0 0.0
    %1427 = vmatpush1.msra.mxu0 0.0
    %1428 = vmatprep.subr.mxu0 0.0
    %1429 = vmatpush1.msra.mxu0 0.0
    %1430 = vmatprep.subr.mxu0 0.0
    %1431 = vmatpush1.msra.mxu0 0.0
    %1432 = vmatprep.subr.mxu0 0.0
    %1433 = vmatpush1.msra.mxu0 0.0
    %1434 = vmatprep.subr.mxu0 0.0
    %1435 = vmatpush1.msra.mxu0 0.0
    %1436 = vmatprep.subr.mxu0 0.0
    %1437 = vmatpush1.msra.mxu0 0.0
    %1438 = vmatprep.subr.mxu0 0.0
    %1439 = vmatpush1.msra.mxu0 0.0
    %1440 = vmatprep.subr.mxu0 0.0
    %1441 = vmatpush1.msra.mxu0 0.0
    %1442 = vmatprep.subr.mxu0 0.0
    %1443 = vmatpush1.msra.mxu0 0.0
    %1444 = vmatprep.subr.mxu0 0.0
    %1445 = vmatpush1.msra.mxu0 0.0
    %1446 = vmatprep.subr.mxu0 0.0
    %1447 = vmatpush1.msra.mxu0 0.0
    %1448 = vmatprep.subr.mxu0 0.0
    %1449 = vmatpush1.msra.mxu0 0.0
    %1450 = vmatprep.subr.mxu0 0.0
    %1451 = vmatpush1.msra.mxu0 0.0
    %1452 = vmatprep.mubr.f32.mxu0 0.0
    %1453 = vmatmul.mubr.f32.gmra.mrb[0].mxu0 %v1383
    %v1454 = vpop.f32.mrb[0].mxu0
    %v1455 = vadd.f32 0.0, %v1454
    %v1456 = vpop.f32.mrb[0].mxu0
    %1457 = vmatprep.mubr.f32.mxu0 0.0
    %1458 = vmatmul.mubr.f32.gmra.mrb[0].mxu0 %v1386
    %v1459 = vpop.f32.mrb[0].mxu0
    %v1460 = vadd.f32 0.0, %v1459
    %v1461 = vpop.f32.mrb[0].mxu0
    %1462 = vdwg.mxu0
    %v1463 = vadd.f32 %v1178, %v1455
    %v1464 = vadd.f32 %v1179, %v1460
    %v1465 = vld [vmem:[%s7] sm:$0x1]
    %v1467 = vlaneseq
    %v1468 = vshrl.u32 %v1467, 7
    %v1469 = vsub.s32 0, %v1468
    %v1470 = vrot.slane %v1465, %v1469
    %v1472 = vadd.f32 %v1463, %v1470
    %v1473 = vadd.f32 %v1464, %v1470
    %v1474 = vadd.f32 %v95, %v1472
    %v1475 = vadd.f32 %v96, %v1473
    %v1476 = vsel %vm112, %v1474, 0.0
    %1477 = vadd.xlane.f32.xlu0 %v1476
    %v1478 = vpop.xlane.xlu0 %1477
    %v1479 = vsel %vm112, %v1475, 0.0
    %1480 = vadd.xlane.f32.xlu0 %v1479
    %v1481 = vpop.xlane.xlu0 %1480
    %v1482 = vrcp.pop 32.0
    %v1483 = vmul.f32 %v1478, %v1482
    %v1484 = vmul.f32 %v1481, %v1482
    %v1485 = vsub.f32 %v1474, %v1483
    %v1486 = vsub.f32 %v1475, %v1484
    %v1487 = vmul.f32 %v1485, %v1485
    %v1488 = vmul.f32 %v1486, %v1486
    %v1489 = vsel %vm112, %v1487, 0.0
    %1490 = vadd.xlane.f32.xlu0 %v1489
    %v1491 = vpop.xlane.xlu0 %1490
    %v1492 = vsel %vm112, %v1488, 0.0
    %1493 = vadd.xlane.f32.xlu0 %v1492
    %v1494 = vpop.xlane.xlu0 %1493
    %v1495 = vmul.f32 %v1491, %v1482
    %v1496 = vmul.f32 %v1494, %v1482
    %v1497 = vadd.f32 %v1495, 1e-05
    %v1498 = vadd.f32 %v1496, 1e-05
    %v1499 = vrsqrt.pop %v1497
    %v1500 = vrsqrt.pop %v1498
    %v1501 = vmul.f32 %v1485, %v1499
    %v1502 = vmul.f32 %v1486, %v1500
    %v1503 = vld [vmem:[%s12] sm:$0x1]
    %v1505 = vlaneseq
    %v1506 = vshrl.u32 %v1505, 7
    %v1507 = vsub.s32 0, %v1506
    %v1508 = vrot.slane %v1503, %v1507
    %v1510 = vmul.f32 %v1501, %v1508
    %v1511 = vmul.f32 %v1502, %v1508
    %v1512 = vld [vmem:[%s13] sm:$0x1]
    %v1514 = vlaneseq
    %v1515 = vshrl.u32 %v1514, 7
    %v1516 = vsub.s32 0, %v1515
    %v1517 = vrot.slane %v1512, %v1516
    %v1519 = vadd.f32 %v1510, %v1517
    %v1520 = vadd.f32 %v1511, %v1517
    %v1521 = vld [vmem:[#allocation7] sm:$0xff]
    %v1522 = vld [vmem:[#allocation7 + $0x8] sm:$0xff]
    %v1523 = vld [vmem:[#allocation7 + $0x10] sm:$0xff]
    %v1524 = vld [vmem:[#allocation7 + $0x18] sm:$0xff]
    %v1525 = vld [vmem:[%s9] sm:$0x1]
    %v1527 = vlaneseq
    %v1528 = vshrl.u32 %v1527, 7
    %v1529 = vsub.s32 0, %v1528
    %v1530 = vrot.slane %v1525, %v1529
    %v1533 = vsel %vm112, %v1519, 0
    %v1536 = vsel %vm112, %v1520, 0
    %1538 = vmatprep.subr.mxu0 0.0
    %1539 = vmatpush1.msra.mxu0 %v1521
    %1540 = vmatprep.subr.mxu0 0.0
    %1541 = vmatpush1.msra.mxu0 %v1522
    %1542 = vmatprep.subr.mxu0 0.0
    %1543 = vmatpush1.msra.mxu0 %v1523
    %1544 = vmatprep.subr.mxu0 0.0
    %1545 = vmatpush1.msra.mxu0 %v1524
    %1546 = vmatprep.subr.mxu0 0.0
    %1547 = vmatpush1.msra.mxu0 0.0
    %1548 = vmatprep.subr.mxu0 0.0
    %1549 = vmatpush1.msra.mxu0 0.0
    %1550 = vmatprep.subr.mxu0 0.0
    %1551 = vmatpush1.msra.mxu0 0.0
    %1552 = vmatprep.subr.mxu0 0.0
    %1553 = vmatpush1.msra.mxu0 0.0
    %1554 = vmatprep.subr.mxu0 0.0
    %1555 = vmatpush1.msra.mxu0 0.0
    %1556 = vmatprep.subr.mxu0 0.0
    %1557 = vmatpush1.msra.mxu0 0.0
    %1558 = vmatprep.subr.mxu0 0.0
    %1559 = vmatpush1.msra.mxu0 0.0
    %1560 = vmatprep.subr.mxu0 0.0
    %1561 = vmatpush1.msra.mxu0 0.0
    %1562 = vmatprep.subr.mxu0 0.0
    %1563 = vmatpush1.msra.mxu0 0.0
    %1564 = vmatprep.subr.mxu0 0.0
    %1565 = vmatpush1.msra.mxu0 0.0
    %1566 = vmatprep.subr.mxu0 0.0
    %1567 = vmatpush1.msra.mxu0 0.0
    %1568 = vmatprep.subr.mxu0 0.0
    %1569 = vmatpush1.msra.mxu0 0.0
    %1570 = vmatprep.subr.mxu0 0.0
    %1571 = vmatpush1.msra.mxu0 0.0
    %1572 = vmatprep.subr.mxu0 0.0
    %1573 = vmatpush1.msra.mxu0 0.0
    %1574 = vmatprep.subr.mxu0 0.0
    %1575 = vmatpush1.msra.mxu0 0.0
    %1576 = vmatprep.subr.mxu0 0.0
    %1577 = vmatpush1.msra.mxu0 0.0
    %1578 = vmatprep.subr.mxu0 0.0
    %1579 = vmatpush1.msra.mxu0 0.0
    %1580 = vmatprep.subr.mxu0 0.0
    %1581 = vmatpush1.msra.mxu0 0.0
    %1582 = vmatprep.subr.mxu0 0.0
    %1583 = vmatpush1.msra.mxu0 0.0
    %1584 = vmatprep.subr.mxu0 0.0
    %1585 = vmatpush1.msra.mxu0 0.0
    %1586 = vmatprep.subr.mxu0 0.0
    %1587 = vmatpush1.msra.mxu0 0.0
    %1588 = vmatprep.subr.mxu0 0.0
    %1589 = vmatpush1.msra.mxu0 0.0
    %1590 = vmatprep.subr.mxu0 0.0
    %1591 = vmatpush1.msra.mxu0 0.0
    %1592 = vmatprep.subr.mxu0 0.0
    %1593 = vmatpush1.msra.mxu0 0.0
    %1594 = vmatprep.subr.mxu0 0.0
    %1595 = vmatpush1.msra.mxu0 0.0
    %1596 = vmatprep.subr.mxu0 0.0
    %1597 = vmatpush1.msra.mxu0 0.0
    %1598 = vmatprep.subr.mxu0 0.0
    %1599 = vmatpush1.msra.mxu0 0.0
    %1600 = vmatprep.subr.mxu0 0.0
    %1601 = vmatpush1.msra.mxu0 0.0
    %1602 = vmatprep.mubr.f32.mxu0 0.0
    %1603 = vmatmul.mubr.f32.gmra.mrb[0].mxu0 %v1533
    %v1604 = vpop.f32.mrb[0].mxu0
    %v1605 = vadd.f32 %v1530, %v1604
    %v1606 = vpop.f32.mrb[0].mxu0
    %1607 = vmatprep.mubr.f32.mxu0 0.0
    %1608 = vmatmul.mubr.f32.gmra.mrb[0].mxu0 %v1536
    %v1609 = vpop.f32.mrb[0].mxu0
    %v1610 = vadd.f32 %v1530, %v1609
    %v1611 = vpop.f32.mrb[0].mxu0
    %1612 = vdwg.mxu0
    %v1613 = vmax.f32 %v1605, 0.0
    %v1614 = vmax.f32 %v1610, 0.0
    %v1615 = vld [vmem:[%s10] sm:$0xff]
    %v1616 = vld [vmem:[%s10 + $0x8] sm:$0xff]
    %v1617 = vld [vmem:[%s10 + $0x10] sm:$0xff]
    %v1618 = vld [vmem:[%s10 + $0x18] sm:$0xff]
    %v1619 = vld [vmem:[%s10 + $0x20] sm:$0xff]
    %v1620 = vld [vmem:[%s10 + $0x28] sm:$0xff]
    %v1621 = vld [vmem:[%s10 + $0x30] sm:$0xff]
    %v1622 = vld [vmem:[%s10 + $0x38] sm:$0xff]
    %v1623 = vld [vmem:[%s11] sm:$0x1]
    %v1625 = vlaneseq
    %v1626 = vshrl.u32 %v1625, 7
    %v1627 = vsub.s32 0, %v1626
    %v1628 = vrot.slane %v1623, %v1627
    %vm1630 = vcmask 523264
    %v1632 = vsel %vm1630, %v1613, 0
    %v1635 = vsel %vm1630, %v1614, 0
    %1637 = vmatprep.subr.mxu0 0.0
    %1638 = vmatpush1.msra.mxu0 %v1615
    %1639 = vmatprep.subr.mxu0 0.0
    %1640 = vmatpush1.msra.mxu0 %v1616
    %1641 = vmatprep.subr.mxu0 0.0
    %1642 = vmatpush1.msra.mxu0 %v1617
    %1643 = vmatprep.subr.mxu0 0.0
    %1644 = vmatpush1.msra.mxu0 %v1618
    %1645 = vmatprep.subr.mxu0 0.0
    %1646 = vmatpush1.msra.mxu0 %v1619
    %1647 = vmatprep.subr.mxu0 0.0
    %1648 = vmatpush1.msra.mxu0 %v1620
    %1649 = vmatprep.subr.mxu0 0.0
    %1650 = vmatpush1.msra.mxu0 %v1621
    %1651 = vmatprep.subr.mxu0 0.0
    %1652 = vmatpush1.msra.mxu0 %v1622
    %1653 = vmatprep.subr.mxu0 0.0
    %1654 = vmatpush1.msra.mxu0 0.0
    %1655 = vmatprep.subr.mxu0 0.0
    %1656 = vmatpush1.msra.mxu0 0.0
    %1657 = vmatprep.subr.mxu0 0.0
    %1658 = vmatpush1.msra.mxu0 0.0
    %1659 = vmatprep.subr.mxu0 0.0
    %1660 = vmatpush1.msra.mxu0 0.0
    %1661 = vmatprep.subr.mxu0 0.0
    %1662 = vmatpush1.msra.mxu0 0.0
    %1663 = vmatprep.subr.mxu0 0.0
    %1664 = vmatpush1.msra.mxu0 0.0
    %1665 = vmatprep.subr.mxu0 0.0
    %1666 = vmatpush1.msra.mxu0 0.0
    %1667 = vmatprep.subr.mxu0 0.0
    %1668 = vmatpush1.msra.mxu0 0.0
    %1669 = vmatprep.subr.mxu0 0.0
    %1670 = vmatpush1.msra.mxu0 0.0
    %1671 = vmatprep.subr.mxu0 0.0
    %1672 = vmatpush1.msra.mxu0 0.0
    %1673 = vmatprep.subr.mxu0 0.0
    %1674 = vmatpush1.msra.mxu0 0.0
    %1675 = vmatprep.subr.mxu0 0.0
    %1676 = vmatpush1.msra.mxu0 0.0
    %1677 = vmatprep.subr.mxu0 0.0
    %1678 = vmatpush1.msra.mxu0 0.0
    %1679 = vmatprep.subr.mxu0 0.0
    %1680 = vmatpush1.msra.mxu0 0.0
    %1681 = vmatprep.subr.mxu0 0.0
    %1682 = vmatpush1.msra.mxu0 0.0
    %1683 = vmatprep.subr.mxu0 0.0
    %1684 = vmatpush1.msra.mxu0 0.0
    %1685 = vmatprep.subr.mxu0 0.0
    %1686 = vmatpush1.msra.mxu0 0.0
    %1687 = vmatprep.subr.mxu0 0.0
    %1688 = vmatpush1.msra.mxu0 0.0
    %1689 = vmatprep.subr.mxu0 0.0
    %1690 = vmatpush1.msra.mxu0 0.0
    %1691 = vmatprep.subr.mxu0 0.0
    %1692 = vmatpush1.msra.mxu0 0.0
    %1693 = vmatprep.subr.mxu0 0.0
    %1694 = vmatpush1.msra.mxu0 0.0
    %1695 = vmatprep.subr.mxu0 0.0
    %1696 = vmatpush1.msra.mxu0 0.0
    %1697 = vmatprep.subr.mxu0 0.0
    %1698 = vmatpush1.msra.mxu0 0.0
    %1699 = vmatprep.subr.mxu0 0.0
    %1700 = vmatpush1.msra.mxu0 0.0
    %1701 = vmatprep.mubr.f32.mxu0 0.0
    %1702 = vmatmul.mubr.f32.gmra.mrb[0].mxu0 %v1632
    %v1703 = vpop.f32.mrb[0].mxu0
    %v1704 = vadd.f32 %v1628, %v1703
    %v1705 = vpop.f32.mrb[0].mxu0
    %1706 = vmatprep.mubr.f32.mxu0 0.0
    %1707 = vmatmul.mubr.f32.gmra.mrb[0].mxu0 %v1635
    %v1708 = vpop.f32.mrb[0].mxu0
    %v1709 = vadd.f32 %v1628, %v1708
    %v1710 = vpop.f32.mrb[0].mxu0
    %1711 = vdwg.mxu0
    %v1712 = vadd.f32 %v1519, %v1704
    %v1713 = vadd.f32 %v1520, %v1709
    %v1714 = vsel %vm112, %v1712, 0.0
    %1715 = vadd.xlane.f32.xlu0 %v1714
    %v1716 = vpop.xlane.xlu0 %1715
    %v1717 = vsel %vm112, %v1713, 0.0
    %1718 = vadd.xlane.f32.xlu0 %v1717
    %v1719 = vpop.xlane.xlu0 %1718
    %v1720 = vmul.f32 %v1716, %v1482
    %v1721 = vmul.f32 %v1719, %v1482
    %v1722 = vsub.f32 %v1712, %v1720
    %v1723 = vsub.f32 %v1713, %v1721
    %v1724 = vmul.f32 %v1722, %v1722
    %v1725 = vmul.f32 %v1723, %v1723
    %v1726 = vsel %vm112, %v1724, 0.0
    %1727 = vadd.xlane.f32.xlu0 %v1726
    %v1728 = vpop.xlane.xlu0 %1727
    %v1729 = vsel %vm112, %v1725, 0.0
    %1730 = vadd.xlane.f32.xlu0 %v1729
    %v1731 = vpop.xlane.xlu0 %1730
    %v1732 = vmul.f32 %v1728, %v1482
    %v1733 = vmul.f32 %v1731, %v1482
    %v1734 = vadd.f32 %v1732, 1e-05
    %v1735 = vadd.f32 %v1733, 1e-05
    %v1736 = vrsqrt.pop %v1734
    %v1737 = vrsqrt.pop %v1735
    %v1738 = vmul.f32 %v1722, %v1736
    %v1739 = vmul.f32 %v1723, %v1737
    %v1740 = vld [vmem:[%s14] sm:$0x1]
    %v1742 = vlaneseq
    %v1743 = vshrl.u32 %v1742, 7
    %v1744 = vsub.s32 0, %v1743
    %v1745 = vrot.slane %v1740, %v1744
    %v1747 = vmul.f32 %v1738, %v1745
    %v1748 = vmul.f32 %v1739, %v1745
    %v1749 = vld [vmem:[%s15] sm:$0x1]
    %v1751 = vlaneseq
    %v1752 = vshrl.u32 %v1751, 7
    %v1753 = vsub.s32 0, %v1752
    %v1754 = vrot.slane %v1749, %v1753
    %v1756 = vadd.f32 %v1747, %v1754
    %v1757 = vadd.f32 %v1748, %v1754
    %1758 = vst.msk [vmem:[#allocation8] sm:$0xff] %vm112, %v1756
    %1759 = vst.msk [vmem:[#allocation8 + $0x8] sm:$0xff] %vm112, %v1757
    // Predicated region
    $region78: #{tpu_custom_call.1} parent=1 // pred_check
      _
    $region79: #{tpu_custom_call.1} parent=1 // pred_check_branch
      %1761 = sbr.rel (0) target = $region81
    $region80: #{tpu_custom_call.1} parent=1 // pred_region
      %s1763 = ssub.s32 256, 256
      %1764 = vsyncadd [#allocation4], %s1763
      %s1765 = sshll.u32 [#allocation8], 4
      %s1766 = int_to_ptr.vmem [resolvable:$true] %s1765
      %1771 = dma.vmem_to_hbm [thread:$0]  %s1766, 256, %s16, [#allocation4], 128, 128, 8
    $region81: #{tpu_custom_call.1} parent=1 // pred_fallthru
      _
    // Predicated region
    $region82: #{tpu_custom_call.1} parent=1 // pred_check
      _
    $region83: #{tpu_custom_call.1} parent=1 // pred_check_branch
      %1773 = sbr.rel (0) target = $region85
    $region84: #{tpu_custom_call.1} parent=1 // pred_region
      %1774 = dma.done [#allocation4], 256
    $region85: #{tpu_custom_call.1} parent=1 // pred_fallthru
      _
    %1775 = vsyncpa [#allocation3], 1
    %1776 = vsyncpa [#allocation6], 1
    %1777 = vsyncpa [#allocation4], 1

</llo_original>
